<compile_context>
chip_gen: v7x
topology: tpu7x:2x2x1
jax: 0.10.0
libtpu: 0.0.40
codegen_flags: <defaults>
</compile_context>

<pallas_src>
import jax
import jax.numpy as jnp
from jax.experimental import pallas as pl
from jax.experimental.pallas import tpu as pltpu


def _round_up(x, m):
    return ((x + m - 1) // m) * m


def _assemble_kernel(prefix_ref, ctx_ref, suffix_ref, prompts_ref):
    # Block views:
    #   prefix_ref : (c_tile, D)           -- SOS embeddings, sublane-dense 2D block
    #   ctx_ref    : (n_sets, n_ctx, D)    -- all learned context sets (tiny, resident)
    #   suffix_ref : (c_tile, suf_len, D)  -- classname + EOS embeddings for this tile
    #   prompts_ref: (n_sets, c_tile, seq, D)
    pre = prefix_ref[...]                    # (c_tile, D)
    suf = suffix_ref[...]                    # (c_tile, suf_len, D)
    c_tile, d = pre.shape
    n_sets, n_ctx, _ = ctx_ref.shape
    pre3 = pre[:, None, :]                   # (c_tile, 1, D) -- add the seq axis back

    # Static (trace-time) loop over the 5 context sets.
    # Three direct sub-slice stores per set: no concatenated VMEM temporary.
    for s in range(n_sets):
        ctx = ctx_ref[s]                                             # (n_ctx, D)
        ctx_b = jnp.broadcast_to(ctx[None], (c_tile, n_ctx, d))      # expand over classes
        prompts_ref[s, :, 0:1, :] = pre3
        prompts_ref[s, :, 1:1 + n_ctx, :] = ctx_b
        prompts_ref[s, :, 1 + n_ctx:, :] = suf


def _vmem_capacity_bytes():
    try:
        return int(pltpu.get_tpu_info().vmem_capacity_bytes)
    except Exception:
        return 64 << 20  # conservative per-TC fallback (v7x-sized)


def prompt_learner_forward(token_prefix, token_suffix, ctx_stack, *, c_tile=None):
    """
    token_prefix: (n_cls, 1, D)      -- frozen SOS-token embeddings
    token_suffix: (n_cls, L_suf, D)  -- frozen classname + EOS embeddings
    ctx_stack   : (n_sets=5, n_ctx, D) -- the 5 learned generic contexts, stacked

    Returns (prompts_list, ctxs_list) mirroring PromptLearner.forward():
      prompts_list: n_sets arrays of shape (n_cls, 1 + n_ctx + L_suf, D)
      ctxs_list   : n_sets arrays of shape (n_cls, n_ctx, D)
    """
    n_cls, _, D = token_prefix.shape
    n_sets, n_ctx, _ = ctx_stack.shape
    suf_len = token_suffix.shape[1]
    seq = 1 + n_ctx + suf_len
    dtype = token_prefix.dtype
    itemsize = jnp.dtype(dtype).itemsize

    sub = max(8, (4 // itemsize) * 8)        # sublane group: 8 (f32), 16 (bf16), 32 (i8)
    lane_d = _round_up(D, 128)               # padded lane width

    # Generation-aware VMEM budget / limit cap.
    vmem_phys = _vmem_capacity_bytes()
    if vmem_phys <= (64 << 20):              # v7x: 64 MiB per TensorCore
        budget, limit_cap = 36 << 20, 56 << 20
    else:                                    # v5e / v6e: 128 MiB
        budget, limit_cap = 64 << 20, int(min(vmem_phys - (16 << 20), 100 << 20))

    # Padded VMEM bytes for all double-buffered blocks at a given class tile.
    def _vmem_bytes(ct):
        pre_b = _round_up(ct, sub) * lane_d
        suf_b = ct * _round_up(suf_len, sub) * lane_d
        ctx_b = n_sets * _round_up(n_ctx, sub) * lane_d
        out_b = n_sets * ct * _round_up(seq, sub) * lane_d
        return 2 * itemsize * (pre_b + suf_b + ctx_b + out_b)

    if c_tile is None:
        per_cls = 2 * itemsize * lane_d * (1 + _round_up(suf_len, sub)
                                           + n_sets * _round_up(seq, sub))
        fixed = 2 * itemsize * n_sets * _round_up(n_ctx, sub) * lane_d
        c_tile = max(1, (budget - fixed) // max(per_cls, 1))
        if c_tile >= n_cls:
            c_tile = n_cls
        else:
            c_tile = max(sub, (c_tile // sub) * sub)          # sublane-aligned
        # Keep >= 2 grid steps so the "parallel" class axis can shard across
        # v7x's two TensorCores (negligible cost on single-TC v5e/v6e).
        if n_cls >= 2 * sub:
            c_tile = min(c_tile, _round_up(pl.cdiv(n_cls, 2), sub))
        # Prefer a tile dividing n_cls (no ragged masked last step) unless it
        # would shrink the tile by more than 2x.
        if 0 < c_tile < n_cls and n_cls % c_tile != 0:
            t = c_tile
            while t >= max(sub, c_tile // 2):
                if n_cls % t == 0:
                    c_tile = t
                    break
                t -= sub
        c_tile = int(max(1, min(c_tile, n_cls)))

    grid = (pl.cdiv(n_cls, c_tile),)
    vmem_limit = int(min(max(_vmem_bytes(c_tile) + (4 << 20), 32 << 20), limit_cap))

    # Free metadata reshape: (n_cls, 1, D) -> (n_cls, D) for a sublane-dense block.
    prefix_2d = token_prefix.reshape(n_cls, D)

    prompts = pl.pallas_call(
        _assemble_kernel,
        out_shape=jax.ShapeDtypeStruct((n_sets, n_cls, seq, D), dtype),
        grid_spec=pltpu.PrefetchScalarGridSpec(
            num_scalar_prefetch=0,
            grid=grid,
            in_specs=[
                # prefix: sublane-dense per-class tile, reused for all sets per step
                pl.BlockSpec((c_tile, D), lambda c: (c, 0)),
                # ctx: all sets, tiny, constant block index -> stays resident
                pl.BlockSpec((n_sets, n_ctx, D), lambda c: (0, 0, 0)),
                # suffix: per-class tile, reused for all sets per step
                pl.BlockSpec((c_tile, suf_len, D), lambda c: (c, 0, 0)),
            ],
            out_specs=pl.BlockSpec((n_sets, c_tile, seq, D),
                                   lambda c: (0, c, 0, 0)),
        ),
        compiler_params=pltpu.CompilerParams(
            dimension_semantics=("parallel",),
            vmem_limit_bytes=vmem_limit,
        ),
    )(prefix_2d, ctx_stack, token_suffix)

    # ctx.unsqueeze(0).expand(n_cls, -1, -1): never materialized inside the
    # memory-bound kernel; returned as a (lazy where possible) broadcast.
    ctxs = jnp.broadcast_to(ctx_stack[:, None], (n_sets, n_cls, n_ctx, D))

    prompts_list = [prompts[k] for k in range(n_sets)]
    ctxs_list = [ctxs[k] for k in range(n_sets)]
    return prompts_list, ctxs_list


if __name__ == "__main__":
    # Small, deterministic synthetic setup consistent with the module's __init__:
    #   n_cls classes, n_ctx context tokens, ctx_dim embedding width (lane-dense),
    #   full tokenized-prompt length seq (CLIP uses 77 / D=512; shrunk here).
    n_cls = 16
    n_ctx = 4
    ctx_dim = 128
    seq = 24
    suf_len = seq - 1 - n_ctx
    n_sets = 5
    dtype = jnp.float32

    key = jax.random.PRNGKey(0)
    k_emb, k1, k2, k3, k4, k5 = jax.random.split(key, 6)

    # Synthetic "clip_model.token_embedding(tokenized_prompts)" output.
    # TODO(synk): the real module derives these from a CLIP tokenizer + frozen
    # embedding table (host-side, __init__-time); here they are deterministic
    # random embeddings of the same shapes.
    embedding = jax.random.normal(k_emb, (n_cls, seq, ctx_dim), dtype=dtype)
    token_prefix = embedding[:, :1, :]            # (n_cls, 1, D)
    token_suffix = embedding[:, 1 + n_ctx:, :]    # (n_cls, suf_len, D)

    # 5 generic-context parameters, nn.init.normal_(std=0.02).
    ctx_params = [
        0.02 * jax.random.normal(k, (n_ctx, ctx_dim), dtype=dtype)
        for k in (k1, k2, k3, k4, k5)
    ]
    ctx_stack = jnp.stack(ctx_params, axis=0)     # (5, n_ctx, D)

    prompts_list, ctxs_list = jax.jit(prompt_learner_forward)(
        token_prefix, token_suffix, ctx_stack
    )
    jax.block_until_ready(prompts_list)
    jax.block_until_ready(ctxs_list)

    # Reference check against plain-JAX semantics of PromptLearner.forward().
    ok = True
    for k in range(n_sets):
        ctx_exp = jnp.broadcast_to(ctx_stack[k][None], (n_cls, n_ctx, ctx_dim))
        ref_prompts = jnp.concatenate([token_prefix, ctx_exp, token_suffix], axis=1)
        ok &= bool(jnp.allclose(prompts_list[k], ref_prompts))
        ok &= bool(jnp.allclose(ctxs_list[k], ctx_exp))
        ok &= prompts_list[k].shape == (n_cls, seq, ctx_dim)
        ok &= ctxs_list[k].shape == (n_cls, n_ctx, ctx_dim)

    if ok:
        print("KERNEL_OK")
    else:
        raise SystemExit("mismatch vs reference")
</pallas_src>

<mosaic_0001>
module attributes {stable_mosaic.version = 11 : i64} {
  func.func @_assemble_kernel(%arg0: i32, %arg1: memref<8x128xf32, #tpu.memory_space<vmem>>, %arg2: memref<5x4x128xf32, #tpu.memory_space<vmem>>, %arg3: memref<8x19x128xf32, #tpu.memory_space<vmem>>, %arg4: memref<5x8x24x128xf32, #tpu.memory_space<vmem>>) attributes {dimension_semantics = [#tpu.dimension_semantics<parallel>], iteration_bounds = array<i64: 2>, scalar_prefetch = 0 : i64, scratch_operands = 0 : i64, tpu.core_type = #tpu.core_type<tc>, window_params = [{transform_indices = @transform_0, window_bounds = array<i64: 8, 128>}, {pipeline_mode = #tpu.pipeline_mode<synchronous>, transform_indices = @transform_1, window_bounds = array<i64: 5, 4, 128>}, {transform_indices = @transform_2, window_bounds = array<i64: 8, 19, 128>}, {transform_indices = @transform_3, window_bounds = array<i64: 5, 8, 24, 128>}]} {
    %c0 = arith.constant 0 : index
    %c0_0 = arith.constant 0 : index
    %0 = vector.load %arg1[%c0, %c0_0] : memref<8x128xf32, #tpu.memory_space<vmem>>, vector<8x128xf32>
    %c0_1 = arith.constant 0 : index
    %c0_2 = arith.constant 0 : index
    %c0_3 = arith.constant 0 : index
    %1 = vector.load %arg3[%c0_1, %c0_2, %c0_3] : memref<8x19x128xf32, #tpu.memory_space<vmem>>, vector<8x19x128xf32>
    %2 = vector.shape_cast %0 : vector<8x128xf32> to vector<8x1x128xf32>
    %c0_4 = arith.constant 0 : index
    %c0_5 = arith.constant 0 : index
    %c0_6 = arith.constant 0 : index
    %3 = vector.load %arg2[%c0_4, %c0_5, %c0_6] : memref<5x4x128xf32, #tpu.memory_space<vmem>>, vector<1x4x128xf32>
    %4 = vector.shape_cast %3 : vector<1x4x128xf32> to vector<4x128xf32>
    %5 = vector.shape_cast %4 : vector<4x128xf32> to vector<1x4x128xf32>
    %6 = vector.shape_cast %5 : vector<1x4x128xf32> to vector<1x4x128xf32>
    %7 = vector.broadcast %6 : vector<1x4x128xf32> to vector<8x4x128xf32>
    %c0_7 = arith.constant 0 : index
    %c0_8 = arith.constant 0 : index
    %c0_9 = arith.constant 0 : index
    %c0_10 = arith.constant 0 : index
    %8 = vector.load %arg4[%c0_7, %c0_8, %c0_9, %c0_10] : memref<5x8x24x128xf32, #tpu.memory_space<vmem>>, vector<1x8x1x128xf32>
    %9 = vector.shape_cast %8 : vector<1x8x1x128xf32> to vector<8x1x128xf32>
    %10 = vector.shape_cast %2 : vector<8x1x128xf32> to vector<1x8x1x128xf32>
    tpu.vector_store %arg4[%c0_7, %c0_8, %c0_9, %c0_10], %10 {strides = array<i32>} : memref<5x8x24x128xf32, #tpu.memory_space<vmem>>, vector<1x8x1x128xf32>,
    %c0_11 = arith.constant 0 : index
    %c0_12 = arith.constant 0 : index
    %c1 = arith.constant 1 : index
    %c0_13 = arith.constant 0 : index
    %11 = vector.load %arg4[%c0_11, %c0_12, %c1, %c0_13] : memref<5x8x24x128xf32, #tpu.memory_space<vmem>>, vector<1x8x4x128xf32>
    %12 = vector.shape_cast %11 : vector<1x8x4x128xf32> to vector<8x4x128xf32>
    %13 = vector.shape_cast %7 : vector<8x4x128xf32> to vector<1x8x4x128xf32>
    tpu.vector_store %arg4[%c0_11, %c0_12, %c1, %c0_13], %13 {strides = array<i32>} : memref<5x8x24x128xf32, #tpu.memory_space<vmem>>, vector<1x8x4x128xf32>,
    %c0_14 = arith.constant 0 : index
    %c0_15 = arith.constant 0 : index
    %c5 = arith.constant 5 : index
    %c0_16 = arith.constant 0 : index
    %14 = vector.load %arg4[%c0_14, %c0_15, %c5, %c0_16] : memref<5x8x24x128xf32, #tpu.memory_space<vmem>>, vector<1x8x19x128xf32>
    %15 = vector.shape_cast %14 : vector<1x8x19x128xf32> to vector<8x19x128xf32>
    %16 = vector.shape_cast %1 : vector<8x19x128xf32> to vector<1x8x19x128xf32>
    tpu.vector_store %arg4[%c0_14, %c0_15, %c5, %c0_16], %16 {strides = array<i32>} : memref<5x8x24x128xf32, #tpu.memory_space<vmem>>, vector<1x8x19x128xf32>,
    %c1_17 = arith.constant 1 : index
    %c0_18 = arith.constant 0 : index
    %c0_19 = arith.constant 0 : index
    %17 = vector.load %arg2[%c1_17, %c0_18, %c0_19] : memref<5x4x128xf32, #tpu.memory_space<vmem>>, vector<1x4x128xf32>
    %18 = vector.shape_cast %17 : vector<1x4x128xf32> to vector<4x128xf32>
    %19 = vector.shape_cast %18 : vector<4x128xf32> to vector<1x4x128xf32>
    %20 = vector.shape_cast %19 : vector<1x4x128xf32> to vector<1x4x128xf32>
    %21 = vector.broadcast %20 : vector<1x4x128xf32> to vector<8x4x128xf32>
    %c1_20 = arith.constant 1 : index
    %c0_21 = arith.constant 0 : index
    %c0_22 = arith.constant 0 : index
    %c0_23 = arith.constant 0 : index
    %22 = vector.load %arg4[%c1_20, %c0_21, %c0_22, %c0_23] : memref<5x8x24x128xf32, #tpu.memory_space<vmem>>, vector<1x8x1x128xf32>
    %23 = vector.shape_cast %22 : vector<1x8x1x128xf32> to vector<8x1x128xf32>
    %24 = vector.shape_cast %2 : vector<8x1x128xf32> to vector<1x8x1x128xf32>
    tpu.vector_store %arg4[%c1_20, %c0_21, %c0_22, %c0_23], %24 {strides = array<i32>} : memref<5x8x24x128xf32, #tpu.memory_space<vmem>>, vector<1x8x1x128xf32>,
    %c1_24 = arith.constant 1 : index
    %c0_25 = arith.constant 0 : index
    %c1_26 = arith.constant 1 : index
    %c0_27 = arith.constant 0 : index
    %25 = vector.load %arg4[%c1_24, %c0_25, %c1_26, %c0_27] : memref<5x8x24x128xf32, #tpu.memory_space<vmem>>, vector<1x8x4x128xf32>
    %26 = vector.shape_cast %25 : vector<1x8x4x128xf32> to vector<8x4x128xf32>
    %27 = vector.shape_cast %21 : vector<8x4x128xf32> to vector<1x8x4x128xf32>
    tpu.vector_store %arg4[%c1_24, %c0_25, %c1_26, %c0_27], %27 {strides = array<i32>} : memref<5x8x24x128xf32, #tpu.memory_space<vmem>>, vector<1x8x4x128xf32>,
    %c1_28 = arith.constant 1 : index
    %c0_29 = arith.constant 0 : index
    %c5_30 = arith.constant 5 : index
    %c0_31 = arith.constant 0 : index
    %28 = vector.load %arg4[%c1_28, %c0_29, %c5_30, %c0_31] : memref<5x8x24x128xf32, #tpu.memory_space<vmem>>, vector<1x8x19x128xf32>
    %29 = vector.shape_cast %28 : vector<1x8x19x128xf32> to vector<8x19x128xf32>
    %30 = vector.shape_cast %1 : vector<8x19x128xf32> to vector<1x8x19x128xf32>
    tpu.vector_store %arg4[%c1_28, %c0_29, %c5_30, %c0_31], %30 {strides = array<i32>} : memref<5x8x24x128xf32, #tpu.memory_space<vmem>>, vector<1x8x19x128xf32>,
    %c2 = arith.constant 2 : index
    %c0_32 = arith.constant 0 : index
    %c0_33 = arith.constant 0 : index
    %31 = vector.load %arg2[%c2, %c0_32, %c0_33] : memref<5x4x128xf32, #tpu.memory_space<vmem>>, vector<1x4x128xf32>
    %32 = vector.shape_cast %31 : vector<1x4x128xf32> to vector<4x128xf32>
    %33 = vector.shape_cast %32 : vector<4x128xf32> to vector<1x4x128xf32>
    %34 = vector.shape_cast %33 : vector<1x4x128xf32> to vector<1x4x128xf32>
    %35 = vector.broadcast %34 : vector<1x4x128xf32> to vector<8x4x128xf32>
    %c2_34 = arith.constant 2 : index
    %c0_35 = arith.constant 0 : index
    %c0_36 = arith.constant 0 : index
    %c0_37 = arith.constant 0 : index
    %36 = vector.load %arg4[%c2_34, %c0_35, %c0_36, %c0_37] : memref<5x8x24x128xf32, #tpu.memory_space<vmem>>, vector<1x8x1x128xf32>
    %37 = vector.shape_cast %36 : vector<1x8x1x128xf32> to vector<8x1x128xf32>
    %38 = vector.shape_cast %2 : vector<8x1x128xf32> to vector<1x8x1x128xf32>
    tpu.vector_store %arg4[%c2_34, %c0_35, %c0_36, %c0_37], %38 {strides = array<i32>} : memref<5x8x24x128xf32, #tpu.memory_space<vmem>>, vector<1x8x1x128xf32>,
    %c2_38 = arith.constant 2 : index
    %c0_39 = arith.constant 0 : index
    %c1_40 = arith.constant 1 : index
    %c0_41 = arith.constant 0 : index
    %39 = vector.load %arg4[%c2_38, %c0_39, %c1_40, %c0_41] : memref<5x8x24x128xf32, #tpu.memory_space<vmem>>, vector<1x8x4x128xf32>
    %40 = vector.shape_cast %39 : vector<1x8x4x128xf32> to vector<8x4x128xf32>
    %41 = vector.shape_cast %35 : vector<8x4x128xf32> to vector<1x8x4x128xf32>
    tpu.vector_store %arg4[%c2_38, %c0_39, %c1_40, %c0_41], %41 {strides = array<i32>} : memref<5x8x24x128xf32, #tpu.memory_space<vmem>>, vector<1x8x4x128xf32>,
    %c2_42 = arith.constant 2 : index
    %c0_43 = arith.constant 0 : index
    %c5_44 = arith.constant 5 : index
    %c0_45 = arith.constant 0 : index
    %42 = vector.load %arg4[%c2_42, %c0_43, %c5_44, %c0_45] : memref<5x8x24x128xf32, #tpu.memory_space<vmem>>, vector<1x8x19x128xf32>
    %43 = vector.shape_cast %42 : vector<1x8x19x128xf32> to vector<8x19x128xf32>
    %44 = vector.shape_cast %1 : vector<8x19x128xf32> to vector<1x8x19x128xf32>
    tpu.vector_store %arg4[%c2_42, %c0_43, %c5_44, %c0_45], %44 {strides = array<i32>} : memref<5x8x24x128xf32, #tpu.memory_space<vmem>>, vector<1x8x19x128xf32>,
    %c3 = arith.constant 3 : index
    %c0_46 = arith.constant 0 : index
    %c0_47 = arith.constant 0 : index
    %45 = vector.load %arg2[%c3, %c0_46, %c0_47] : memref<5x4x128xf32, #tpu.memory_space<vmem>>, vector<1x4x128xf32>
    %46 = vector.shape_cast %45 : vector<1x4x128xf32> to vector<4x128xf32>
    %47 = vector.shape_cast %46 : vector<4x128xf32> to vector<1x4x128xf32>
    %48 = vector.shape_cast %47 : vector<1x4x128xf32> to vector<1x4x128xf32>
    %49 = vector.broadcast %48 : vector<1x4x128xf32> to vector<8x4x128xf32>
    %c3_48 = arith.constant 3 : index
    %c0_49 = arith.constant 0 : index
    %c0_50 = arith.constant 0 : index
    %c0_51 = arith.constant 0 : index
    %50 = vector.load %arg4[%c3_48, %c0_49, %c0_50, %c0_51] : memref<5x8x24x128xf32, #tpu.memory_space<vmem>>, vector<1x8x1x128xf32>
    %51 = vector.shape_cast %50 : vector<1x8x1x128xf32> to vector<8x1x128xf32>
    %52 = vector.shape_cast %2 : vector<8x1x128xf32> to vector<1x8x1x128xf32>
    tpu.vector_store %arg4[%c3_48, %c0_49, %c0_50, %c0_51], %52 {strides = array<i32>} : memref<5x8x24x128xf32, #tpu.memory_space<vmem>>, vector<1x8x1x128xf32>,
    %c3_52 = arith.constant 3 : index
    %c0_53 = arith.constant 0 : index
    %c1_54 = arith.constant 1 : index
    %c0_55 = arith.constant 0 : index
    %53 = vector.load %arg4[%c3_52, %c0_53, %c1_54, %c0_55] : memref<5x8x24x128xf32, #tpu.memory_space<vmem>>, vector<1x8x4x128xf32>
    %54 = vector.shape_cast %53 : vector<1x8x4x128xf32> to vector<8x4x128xf32>
    %55 = vector.shape_cast %49 : vector<8x4x128xf32> to vector<1x8x4x128xf32>
    tpu.vector_store %arg4[%c3_52, %c0_53, %c1_54, %c0_55], %55 {strides = array<i32>} : memref<5x8x24x128xf32, #tpu.memory_space<vmem>>, vector<1x8x4x128xf32>,
    %c3_56 = arith.constant 3 : index
    %c0_57 = arith.constant 0 : index
    %c5_58 = arith.constant 5 : index
    %c0_59 = arith.constant 0 : index
    %56 = vector.load %arg4[%c3_56, %c0_57, %c5_58, %c0_59] : memref<5x8x24x128xf32, #tpu.memory_space<vmem>>, vector<1x8x19x128xf32>
    %57 = vector.shape_cast %56 : vector<1x8x19x128xf32> to vector<8x19x128xf32>
    %58 = vector.shape_cast %1 : vector<8x19x128xf32> to vector<1x8x19x128xf32>
    tpu.vector_store %arg4[%c3_56, %c0_57, %c5_58, %c0_59], %58 {strides = array<i32>} : memref<5x8x24x128xf32, #tpu.memory_space<vmem>>, vector<1x8x19x128xf32>,
    %c4 = arith.constant 4 : index
    %c0_60 = arith.constant 0 : index
    %c0_61 = arith.constant 0 : index
    %59 = vector.load %arg2[%c4, %c0_60, %c0_61] : memref<5x4x128xf32, #tpu.memory_space<vmem>>, vector<1x4x128xf32>
    %60 = vector.shape_cast %59 : vector<1x4x128xf32> to vector<4x128xf32>
    %61 = vector.shape_cast %60 : vector<4x128xf32> to vector<1x4x128xf32>
    %62 = vector.shape_cast %61 : vector<1x4x128xf32> to vector<1x4x128xf32>
    %63 = vector.broadcast %62 : vector<1x4x128xf32> to vector<8x4x128xf32>
    %c4_62 = arith.constant 4 : index
    %c0_63 = arith.constant 0 : index
    %c0_64 = arith.constant 0 : index
    %c0_65 = arith.constant 0 : index
    %64 = vector.load %arg4[%c4_62, %c0_63, %c0_64, %c0_65] : memref<5x8x24x128xf32, #tpu.memory_space<vmem>>, vector<1x8x1x128xf32>
    %65 = vector.shape_cast %64 : vector<1x8x1x128xf32> to vector<8x1x128xf32>
    %66 = vector.shape_cast %2 : vector<8x1x128xf32> to vector<1x8x1x128xf32>
    tpu.vector_store %arg4[%c4_62, %c0_63, %c0_64, %c0_65], %66 {strides = array<i32>} : memref<5x8x24x128xf32, #tpu.memory_space<vmem>>, vector<1x8x1x128xf32>,
    %c4_66 = arith.constant 4 : index
    %c0_67 = arith.constant 0 : index
    %c1_68 = arith.constant 1 : index
    %c0_69 = arith.constant 0 : index
    %67 = vector.load %arg4[%c4_66, %c0_67, %c1_68, %c0_69] : memref<5x8x24x128xf32, #tpu.memory_space<vmem>>, vector<1x8x4x128xf32>
    %68 = vector.shape_cast %67 : vector<1x8x4x128xf32> to vector<8x4x128xf32>
    %69 = vector.shape_cast %63 : vector<8x4x128xf32> to vector<1x8x4x128xf32>
    tpu.vector_store %arg4[%c4_66, %c0_67, %c1_68, %c0_69], %69 {strides = array<i32>} : memref<5x8x24x128xf32, #tpu.memory_space<vmem>>, vector<1x8x4x128xf32>,
    %c4_70 = arith.constant 4 : index
    %c0_71 = arith.constant 0 : index
    %c5_72 = arith.constant 5 : index
    %c0_73 = arith.constant 0 : index
    %70 = vector.load %arg4[%c4_70, %c0_71, %c5_72, %c0_73] : memref<5x8x24x128xf32, #tpu.memory_space<vmem>>, vector<1x8x19x128xf32>
    %71 = vector.shape_cast %70 : vector<1x8x19x128xf32> to vector<8x19x128xf32>
    %72 = vector.shape_cast %1 : vector<8x19x128xf32> to vector<1x8x19x128xf32>
    tpu.vector_store %arg4[%c4_70, %c0_71, %c5_72, %c0_73], %72 {strides = array<i32>} : memref<5x8x24x128xf32, #tpu.memory_space<vmem>>, vector<1x8x19x128xf32>,
    return
  }
  func.func @transform_0(%arg0: i32) -> (i32, i32) {
    %c0_i32 = arith.constant 0 : i32
    %c0_i32_0 = arith.constant 0 : i32
    return %arg0, %c0_i32 : i32, i32
  }
  func.func @transform_1(%arg0: i32) -> (i32, i32, i32) {
    %c0_i32 = arith.constant 0 : i32
    %c0_i32_0 = arith.constant 0 : i32
    %c0_i32_1 = arith.constant 0 : i32
    %c0_i32_2 = arith.constant 0 : i32
    return %c0_i32, %c0_i32_0, %c0_i32_1 : i32, i32, i32
  }
  func.func @transform_2(%arg0: i32) -> (i32, i32, i32) {
    %c0_i32 = arith.constant 0 : i32
    %c0_i32_0 = arith.constant 0 : i32
    %c0_i32_1 = arith.constant 0 : i32
    return %arg0, %c0_i32, %c0_i32_0 : i32, i32, i32
  }
  func.func @transform_3(%arg0: i32) -> (i32, i32, i32, i32) {
    %c0_i32 = arith.constant 0 : i32
    %c0_i32_0 = arith.constant 0 : i32
    %c0_i32_1 = arith.constant 0 : i32
    %c0_i32_2 = arith.constant 0 : i32
    return %c0_i32, %arg0, %c0_i32_0, %c0_i32_1 : i32, i32, i32, i32
  }
}

</mosaic_0001>

<llo_original>
// kernel: prompt_learner_forward.1
$region0: #{prompt_learner_forward.1}
  #allocation0 [shape = 'u32[]', space=smem, size = 0x4, offset = 0x4, fixed_abs, tag = 'smem constant byte address 0x4 - core index']
  #allocation1 [shape = 'u32[144,128]{1,0:T(1,128)}', space=vmem, size = 0x12000, scoped, tag = 'internal scratch']
  %s0 = inlined_call_operand.vmem [shape: f32[16,128], index: 0, kind: input, shape index: {}]
  %s1 = inlined_call_operand.vmem [shape: f32[5,4,128], index: 1, kind: input, shape index: {}]
  %s2 = inlined_call_operand.vmem [shape: f32[16,19,128], index: 2, kind: input, shape index: {}]
  %s3 = inlined_call_operand.vmem [shape: f32[5,16,24,128], index: 3, kind: output, shape index: {}]
  %s4 = sld [smem:[#allocation0]]
  $region79: #{prompt_learner_forward.1} parent=0
    _
  %s6 = ssub.s32 1, %s4
  %s7 = scalar_select 0, %s6, %s4
  $region1: #{prompt_learner_forward.1} parent=0
    #allocation2 [shape = 'u8[983040]{0}', space=vmem, size = 0xf0000, scoped, tag = 'output window, operand 0']
    loop: start=0, step=1, limit=4
    $region2: #{prompt_learner_forward.1} parent=1 // loop_pre_header
      _
    $region3: #{prompt_learner_forward.1} parent=1 // loop_header
      %s9 = sphi 0, %s13
      %p10 = scmp.ge.s32.totalorder %s9, 4
      %s19 = sphi 0, %s21
      %s22 = sphi 0, %s19
      %s23 = sphi 0, %s22
      %s39 = sphi 0, %s23
      %s43 = sphi 0, %s43
      %s45 = sphi 0, %s43
      %s46 = sphi 0, %s45
      %s60 = sphi 0, %s46
      %s66 = sphi 0, %s68
      %s69 = sphi 0, %s66
      %s70 = sphi 0, %s69
      %s86 = sphi 0, %s70
      %s92 = sphi 0, %s94
      %s95 = sphi 0, %s92
      %s96 = sphi 0, %s95
      %s112 = sphi 0, %s96
    $region4: #{prompt_learner_forward.1} parent=1 // loop_header_branch
      %12 = sbr.rel (%p10) target = $region8
    $region5: #{prompt_learner_forward.1} parent=1 // loop_body
      %s14 = ssub.s32 %s9, 1
      %s15 = ssub.s32 %s9, 2
      %s16 = sadd.s32 %s9, 1
      %s17 = ssub.s32 %s9, %s16
      %p18 = scmp.eq.s32.totalorder %s17, 0
      %s20 = sadd.s32 %s19, 1
      %s21 = scalar_select %p18, %s19, %s20
      %p24 = pneg %p18
      %p25 = scmp.eq.s32.totalorder %s9, 1
      %p26 = por %p24, %p25
      %p27 = scmp.ne.s32.totalorder %s19, %s22
      %p28 = scmp.eq.s32.totalorder %s9, 0
      %p29 = por %p27, %p28
      %p30 = scmp.ne.s32.totalorder %s19, %s22
      %p31 = scmp.eq.s32.totalorder %s14, 1
      %p32 = por %p30, %p31
      %p33 = scmp.ne.s32.totalorder %s22, %s23
      %p34 = scmp.eq.s32.totalorder %s14, 0
      %p35 = por %p33, %p34
      %p36 = scmp.ne.s32.totalorder %s22, %s23
      %p37 = scmp.eq.s32.totalorder %s15, 1
      %p38 = por %p36, %p37
      %p40 = scmp.ne.s32.totalorder %s23, %s39
      %p41 = scmp.eq.s32.totalorder %s15, 0
      %p42 = por %p40, %p41
      %s44 = sadd.s32 %s43, 1
      %p47 = scmp.eq.s32.totalorder %s9, 1
      %p48 = scmp.ne.s32.totalorder %s43, %s45
      %p49 = scmp.eq.s32.totalorder %s9, 0
      %p50 = por %p48, %p49
      %p51 = scmp.ne.s32.totalorder %s43, %s45
      %p52 = scmp.eq.s32.totalorder %s14, 1
      %p53 = por %p51, %p52
      %p54 = scmp.ne.s32.totalorder %s45, %s46
      %p55 = scmp.eq.s32.totalorder %s14, 0
      %p56 = por %p54, %p55
      %p57 = scmp.ne.s32.totalorder %s45, %s46
      %p58 = scmp.eq.s32.totalorder %s15, 1
      %p59 = por %p57, %p58
      %p61 = scmp.ne.s32.totalorder %s46, %s60
      %p62 = scmp.eq.s32.totalorder %s15, 0
      %p63 = por %p61, %p62
      %s64 = ssub.s32 %s9, %s16
      %p65 = scmp.eq.s32.totalorder %s64, 0
      %s67 = sadd.s32 %s66, 1
      %s68 = scalar_select %p65, %s66, %s67
      %p71 = pneg %p65
      %p72 = scmp.eq.s32.totalorder %s9, 1
      %p73 = por %p71, %p72
      %p74 = scmp.ne.s32.totalorder %s66, %s69
      %p75 = scmp.eq.s32.totalorder %s9, 0
      %p76 = por %p74, %p75
      %p77 = scmp.ne.s32.totalorder %s66, %s69
      %p78 = scmp.eq.s32.totalorder %s14, 1
      %p79 = por %p77, %p78
      %p80 = scmp.ne.s32.totalorder %s69, %s70
      %p81 = scmp.eq.s32.totalorder %s14, 0
      %p82 = por %p80, %p81
      %p83 = scmp.ne.s32.totalorder %s69, %s70
      %p84 = scmp.eq.s32.totalorder %s15, 1
      %p85 = por %p83, %p84
      %p87 = scmp.ne.s32.totalorder %s70, %s86
      %p88 = scmp.eq.s32.totalorder %s15, 0
      %p89 = por %p87, %p88
      %s90 = ssub.s32 %s9, %s16
      %p91 = scmp.eq.s32.totalorder %s90, 0
      %s93 = sadd.s32 %s92, 1
      %s94 = scalar_select %p91, %s92, %s93
      %p97 = pneg %p91
      %p98 = scmp.eq.s32.totalorder %s9, 1
      %p99 = por %p97, %p98
      %p100 = scmp.ne.s32.totalorder %s92, %s95
      %p101 = scmp.eq.s32.totalorder %s9, 0
      %p102 = por %p100, %p101
      %p103 = scmp.ne.s32.totalorder %s92, %s95
      %p104 = scmp.eq.s32.totalorder %s14, 1
      %p105 = por %p103, %p104
      %p106 = scmp.ne.s32.totalorder %s95, %s96
      %p107 = scmp.eq.s32.totalorder %s14, 0
      %p108 = por %p106, %p107
      %p109 = scmp.ne.s32.totalorder %s95, %s96
      %p110 = scmp.eq.s32.totalorder %s15, 1
      %p111 = por %p109, %p110
      %p113 = scmp.ne.s32.totalorder %s96, %s112
      %p114 = scmp.eq.s32.totalorder %s15, 0
      %p115 = por %p113, %p114
      %p116 = scmp.le.s32.totalorder 1, %s9
      %p117 = scmp.lt.s32.totalorder %s9, 3
      %p118 = pnand %p116, %p117
      %p119 = pneg %p118
      // Predicated region
      $region9: #{prompt_learner_forward.1} parent=5 // pred_check
        _
      $region10: #{prompt_learner_forward.1} parent=5 // pred_check_branch
        %121 = sbr.rel (%p118) target = $region12
      $region11: #{prompt_learner_forward.1} parent=5 // pred_region
        %s122 = ssub.s32 %s9, 1
        // Predicated region
        $region13: #{prompt_learner_forward.1} parent=11 // pred_check
          %p123 = pneg %p56
        $region14: #{prompt_learner_forward.1} parent=11 // pred_check_branch
          %125 = sbr.rel (%p123) target = $region16
        $region15: #{prompt_learner_forward.1} parent=11 // pred_region
          _
        $region16: #{prompt_learner_forward.1} parent=11 // pred_fallthru
          _
      $region12: #{prompt_learner_forward.1} parent=5 // pred_fallthru
        _
      %p126 = scmp.lt.s32.totalorder %s9, 2
      // Predicated region
      $region17: #{prompt_learner_forward.1} parent=5 // pred_check
        %p127 = pneg %p126
      $region18: #{prompt_learner_forward.1} parent=5 // pred_check_branch
        %129 = sbr.rel (%p127) target = $region20
      $region19: #{prompt_learner_forward.1} parent=5 // pred_region
        // Predicated region
        $region21: #{prompt_learner_forward.1} parent=19 // pred_check
          %p130 = pneg %p29
        $region22: #{prompt_learner_forward.1} parent=19 // pred_check_branch
          %132 = sbr.rel (%p130) target = $region24
        $region23: #{prompt_learner_forward.1} parent=19 // pred_region
          %p133 = scmp.lt.s32.totalorder %s9, 1
          %s134 = scalar_select %p133, %s9, 1
          %s135 = smul.addr %s134, 8
          %s136 = scalar_lea.vmem %s0, %s135
        $region24: #{prompt_learner_forward.1} parent=19 // pred_fallthru
          _
        // Predicated region
        $region25: #{prompt_learner_forward.1} parent=19 // pred_check
          %p137 = pneg %p76
        $region26: #{prompt_learner_forward.1} parent=19 // pred_check_branch
          %139 = sbr.rel (%p137) target = $region28
        $region27: #{prompt_learner_forward.1} parent=19 // pred_region
          %s140 = smul.u32 8, %s9
          %p141 = scmp.lt.s32.totalorder %s140, 15
          %s142 = scalar_select %p141, %s140, 15
          %s143 = smul.addr %s142, 3
          %s144 = smul.addr %s143, 8
          %s145 = scalar_lea.vmem %s2, %s144
          %s146 = smul.u32 8, %s9
        $region28: #{prompt_learner_forward.1} parent=19 // pred_fallthru
          _
      $region20: #{prompt_learner_forward.1} parent=5 // pred_fallthru
        _
      %p147 = scmp.le.s32.totalorder 1, %s9
      %p148 = scmp.lt.s32.totalorder %s9, 3
      %p149 = pnand %p147, %p148
      %p150 = pneg %p149
      // Predicated region
      $region29: #{prompt_learner_forward.1} parent=5 // pred_check
        _
      $region30: #{prompt_learner_forward.1} parent=5 // pred_check_branch
        %152 = sbr.rel (%p149) target = $region32
      $region31: #{prompt_learner_forward.1} parent=5 // pred_region
        %s153 = ssub.s32 %s9, 1
        %p154 = scmp.lt.s32.totalorder %s14, 1
        %s155 = scalar_select %p154, %s14, 1
        %s156 = smul.addr %s155, 8
        %s157 = scalar_lea.vmem %s0, %s156
        %p158 = pneg %p35
        %p159 = pneg %p32
        %p160 = pneg %p56
        %p161 = pneg %p53
        %s162 = smul.u32 8, %s14
        %p163 = scmp.lt.s32.totalorder %s162, 15
        %s164 = scalar_select %p163, %s162, 15
        %s165 = smul.addr %s164, 3
        %s166 = smul.addr %s165, 8
        %s167 = scalar_lea.vmem %s2, %s166
        %p168 = pneg %p82
        %p169 = pneg %p79
        %p170 = pneg %p108
        %p171 = pneg %p105
        %s172 = sand.u32 %s95, 1
        %s173 = sand.u32 %s95, 1
        %s174 = smul.addr %s173, 960
        %s175 = scalar_lea.vmem [#allocation2], %s174
        %p176 = scmp.lt.s32.totalorder %s14, 1
        %s177 = scalar_select %p176, %s14, 1
        %s178 = smul.addr %s177, 8
        %s179 = scalar_lea.vmem %s0, %s178
        %s180 = smul.u32 8, %s14
        %p181 = scmp.lt.s32.totalorder %s180, 15
        %s182 = scalar_select %p181, %s180, 15
        %s183 = smul.addr %s182, 3
        %s184 = smul.addr %s183, 8
        %s185 = scalar_lea.vmem %s2, %s184
        %s186 = smul.u32 8, %s14
        %s187 = smul.u32 8, %s14
        %v188 = vld [vmem:[%s179] sm:$0xff]
        %v189 = vld [vmem:[%s185] sm:$0xff]
        %v190 = vld [vmem:[%s185 + $0x8] sm:$0xff]
        %v191 = vld [vmem:[%s185 + $0x10] sm:$0x7]
        %v192 = vld [vmem:[%s185 + $0x18] sm:$0xff]
        %v193 = vld [vmem:[%s185 + $0x20] sm:$0xff]
        %v194 = vld [vmem:[%s185 + $0x28] sm:$0x7]
        %v195 = vld [vmem:[%s185 + $0x30] sm:$0xff]
        %v196 = vld [vmem:[%s185 + $0x38] sm:$0xff]
        %v197 = vld [vmem:[%s185 + $0x40] sm:$0x7]
        %v198 = vld [vmem:[%s185 + $0x48] sm:$0xff]
        %v199 = vld [vmem:[%s185 + $0x50] sm:$0xff]
        %v200 = vld [vmem:[%s185 + $0x58] sm:$0x7]
        %v201 = vld [vmem:[%s185 + $0x60] sm:$0xff]
        %v202 = vld [vmem:[%s185 + $0x68] sm:$0xff]
        %v203 = vld [vmem:[%s185 + $0x70] sm:$0x7]
        %v204 = vld [vmem:[%s185 + $0x78] sm:$0xff]
        %v205 = vld [vmem:[%s185 + $0x80] sm:$0xff]
        %v206 = vld [vmem:[%s185 + $0x88] sm:$0x7]
        %v207 = vld [vmem:[%s185 + $0x90] sm:$0xff]
        %v208 = vld [vmem:[%s185 + $0x98] sm:$0xff]
        %v209 = vld [vmem:[%s185 + $0xa0] sm:$0x7]
        %v210 = vld [vmem:[%s185 + $0xa8] sm:$0xff]
        %v211 = vld [vmem:[%s185 + $0xb0] sm:$0xff]
        %v212 = vld [vmem:[%s185 + $0xb8] sm:$0x7]
        %v213 = vld [vmem:[%s1] sm:$0xf]
        %v215 = vcombine.high %v188, %v188
        %v217 = vunpack.c.l.s4 1966171168
        %v218 = vunpack.c.0.s8 %v217
        %v219 = vlaneseq
        %v220 = vshrl.u32 %v219, 7
        %v221 = vsub.s32 %v218, %v220
        %v222 = vrot.slane %v188, %v221
        %v224 = vunpack.c.l.s4 1966171168
        %v225 = vunpack.c.0.s8 %v224
        %v226 = vlaneseq
        %v227 = vshrl.u32 %v226, 7
        %v228 = vsub.s32 %v225, %v227
        %v229 = vrot.slane %v215, %v228
        %v230 = vcombine.high %v222, %v222
        %v231 = vcombine.high %v229, %v229
        %v233 = vunpack.c.l.s4 1966171168
        %v234 = vunpack.c.0.s8 %v233
        %v235 = vlaneseq
        %v236 = vshrl.u32 %v235, 7
        %v237 = vsub.s32 %v234, %v236
        %v238 = vrot.slane %v222, %v237
        %v240 = vunpack.c.l.s4 1966171168
        %v241 = vunpack.c.0.s8 %v240
        %v242 = vlaneseq
        %v243 = vshrl.u32 %v242, 7
        %v244 = vsub.s32 %v241, %v243
        %v245 = vrot.slane %v229, %v244
        %v247 = vunpack.c.l.s4 1966171168
        %v248 = vunpack.c.0.s8 %v247
        %v249 = vlaneseq
        %v250 = vshrl.u32 %v249, 7
        %v251 = vsub.s32 %v248, %v250
        %v252 = vrot.slane %v230, %v251
        %v254 = vunpack.c.l.s4 1966171168
        %v255 = vunpack.c.0.s8 %v254
        %v256 = vlaneseq
        %v257 = vshrl.u32 %v256, 7
        %v258 = vsub.s32 %v255, %v257
        %v259 = vrot.slane %v231, %v258
        %v260 = vcombine.high %v238, %v238
        %v261 = vcombine.high %v245, %v245
        %v262 = vcombine.high %v252, %v252
        %v263 = vcombine.high %v259, %v259
        %272 = vst [vmem:[%s175] sm:$0x1] %v238
        %273 = vst [vmem:[%s175 + $0x18] sm:$0x1] %v252
        %274 = vst [vmem:[%s175 + $0x30] sm:$0x1] %v260
        %275 = vst [vmem:[%s175 + $0x48] sm:$0x1] %v262
        %276 = vst [vmem:[%s175 + $0x60] sm:$0x1] %v245
        %277 = vst [vmem:[%s175 + $0x78] sm:$0x1] %v259
        %278 = vst [vmem:[%s175 + $0x90] sm:$0x1] %v261
        %279 = vst [vmem:[%s175 + $0xa8] sm:$0x1] %v263
        %280 = vst [vmem:[%s175 + $0x1] sm:$0xf] %v213
        %281 = vst [vmem:[%s175 + $0x19] sm:$0xf] %v213
        %282 = vst [vmem:[%s175 + $0x31] sm:$0xf] %v213
        %283 = vst [vmem:[%s175 + $0x49] sm:$0xf] %v213
        %284 = vst [vmem:[%s175 + $0x61] sm:$0xf] %v213
        %285 = vst [vmem:[%s175 + $0x79] sm:$0xf] %v213
        %286 = vst [vmem:[%s175 + $0x91] sm:$0xf] %v213
        %287 = vst [vmem:[%s175 + $0xa9] sm:$0xf] %v213
        %288 = vst [vmem:[%s175 + $0x5] sm:$0xff] %v189
        %289 = vst [vmem:[%s175 + $0xd] sm:$0xff] %v190
        %290 = vst [vmem:[%s175 + $0x15] sm:$0x7] %v191
        %291 = vst [vmem:[%s175 + $0x1d] sm:$0xff] %v192
        %292 = vst [vmem:[%s175 + $0x25] sm:$0xff] %v193
        %293 = vst [vmem:[%s175 + $0x2d] sm:$0x7] %v194
        %294 = vst [vmem:[%s175 + $0x35] sm:$0xff] %v195
        %295 = vst [vmem:[%s175 + $0x3d] sm:$0xff] %v196
        %296 = vst [vmem:[%s175 + $0x45] sm:$0x7] %v197
        %297 = vst [vmem:[%s175 + $0x4d] sm:$0xff] %v198
        %298 = vst [vmem:[%s175 + $0x55] sm:$0xff] %v199
        %299 = vst [vmem:[%s175 + $0x5d] sm:$0x7] %v200
        %300 = vst [vmem:[%s175 + $0x65] sm:$0xff] %v201
        %301 = vst [vmem:[%s175 + $0x6d] sm:$0xff] %v202
        %302 = vst [vmem:[%s175 + $0x75] sm:$0x7] %v203
        %303 = vst [vmem:[%s175 + $0x7d] sm:$0xff] %v204
        %304 = vst [vmem:[%s175 + $0x85] sm:$0xff] %v205
        %305 = vst [vmem:[%s175 + $0x8d] sm:$0x7] %v206
        %306 = vst [vmem:[%s175 + $0x95] sm:$0xff] %v207
        %307 = vst [vmem:[%s175 + $0x9d] sm:$0xff] %v208
        %308 = vst [vmem:[%s175 + $0xa5] sm:$0x7] %v209
        %309 = vst [vmem:[%s175 + $0xad] sm:$0xff] %v210
        %310 = vst [vmem:[%s175 + $0xb5] sm:$0xff] %v211
        %311 = vst [vmem:[%s175 + $0xbd] sm:$0x7] %v212
        %s312 = scalar_lea.vmem %s1, 4
        %v313 = vld [vmem:[%s312] sm:$0xf]
        %s314 = scalar_lea.vmem %s175, 192 [#allocation2]
        %315 = vst [vmem:[%s314] sm:$0x1] %v238
        %316 = vst [vmem:[%s314 + $0x18] sm:$0x1] %v252
        %317 = vst [vmem:[%s314 + $0x30] sm:$0x1] %v260
        %318 = vst [vmem:[%s314 + $0x48] sm:$0x1] %v262
        %319 = vst [vmem:[%s314 + $0x60] sm:$0x1] %v245
        %320 = vst [vmem:[%s314 + $0x78] sm:$0x1] %v259
        %321 = vst [vmem:[%s314 + $0x90] sm:$0x1] %v261
        %322 = vst [vmem:[%s314 + $0xa8] sm:$0x1] %v263
        %323 = vst [vmem:[%s314 + $0x1] sm:$0xf] %v313
        %324 = vst [vmem:[%s314 + $0x19] sm:$0xf] %v313
        %325 = vst [vmem:[%s314 + $0x31] sm:$0xf] %v313
        %326 = vst [vmem:[%s314 + $0x49] sm:$0xf] %v313
        %327 = vst [vmem:[%s314 + $0x61] sm:$0xf] %v313
        %328 = vst [vmem:[%s314 + $0x79] sm:$0xf] %v313
        %329 = vst [vmem:[%s314 + $0x91] sm:$0xf] %v313
        %330 = vst [vmem:[%s314 + $0xa9] sm:$0xf] %v313
        %331 = vst [vmem:[%s314 + $0x5] sm:$0xff] %v189
        %332 = vst [vmem:[%s314 + $0xd] sm:$0xff] %v190
        %333 = vst [vmem:[%s314 + $0x15] sm:$0x7] %v191
        %334 = vst [vmem:[%s314 + $0x1d] sm:$0xff] %v192
        %335 = vst [vmem:[%s314 + $0x25] sm:$0xff] %v193
        %336 = vst [vmem:[%s314 + $0x2d] sm:$0x7] %v194
        %337 = vst [vmem:[%s314 + $0x35] sm:$0xff] %v195
        %338 = vst [vmem:[%s314 + $0x3d] sm:$0xff] %v196
        %339 = vst [vmem:[%s314 + $0x45] sm:$0x7] %v197
        %340 = vst [vmem:[%s314 + $0x4d] sm:$0xff] %v198
        %341 = vst [vmem:[%s314 + $0x55] sm:$0xff] %v199
        %342 = vst [vmem:[%s314 + $0x5d] sm:$0x7] %v200
        %343 = vst [vmem:[%s314 + $0x65] sm:$0xff] %v201
        %344 = vst [vmem:[%s314 + $0x6d] sm:$0xff] %v202
        %345 = vst [vmem:[%s314 + $0x75] sm:$0x7] %v203
        %346 = vst [vmem:[%s314 + $0x7d] sm:$0xff] %v204
        %347 = vst [vmem:[%s314 + $0x85] sm:$0xff] %v205
        %348 = vst [vmem:[%s314 + $0x8d] sm:$0x7] %v206
        %349 = vst [vmem:[%s314 + $0x95] sm:$0xff] %v207
        %350 = vst [vmem:[%s314 + $0x9d] sm:$0xff] %v208
        %351 = vst [vmem:[%s314 + $0xa5] sm:$0x7] %v209
        %352 = vst [vmem:[%s314 + $0xad] sm:$0xff] %v210
        %353 = vst [vmem:[%s314 + $0xb5] sm:$0xff] %v211
        %354 = vst [vmem:[%s314 + $0xbd] sm:$0x7] %v212
        %s355 = scalar_lea.vmem %s1, 8
        %v356 = vld [vmem:[%s355] sm:$0xf]
        %s357 = scalar_lea.vmem %s175, 384 [#allocation2]
        %358 = vst [vmem:[%s357] sm:$0x1] %v238
        %359 = vst [vmem:[%s357 + $0x18] sm:$0x1] %v252
        %360 = vst [vmem:[%s357 + $0x30] sm:$0x1] %v260
        %361 = vst [vmem:[%s357 + $0x48] sm:$0x1] %v262
        %362 = vst [vmem:[%s357 + $0x60] sm:$0x1] %v245
        %363 = vst [vmem:[%s357 + $0x78] sm:$0x1] %v259
        %364 = vst [vmem:[%s357 + $0x90] sm:$0x1] %v261
        %365 = vst [vmem:[%s357 + $0xa8] sm:$0x1] %v263
        %366 = vst [vmem:[%s357 + $0x1] sm:$0xf] %v356
        %367 = vst [vmem:[%s357 + $0x19] sm:$0xf] %v356
        %368 = vst [vmem:[%s357 + $0x31] sm:$0xf] %v356
        %369 = vst [vmem:[%s357 + $0x49] sm:$0xf] %v356
        %370 = vst [vmem:[%s357 + $0x61] sm:$0xf] %v356
        %371 = vst [vmem:[%s357 + $0x79] sm:$0xf] %v356
        %372 = vst [vmem:[%s357 + $0x91] sm:$0xf] %v356
        %373 = vst [vmem:[%s357 + $0xa9] sm:$0xf] %v356
        %374 = vst [vmem:[%s357 + $0x5] sm:$0xff] %v189
        %375 = vst [vmem:[%s357 + $0xd] sm:$0xff] %v190
        %376 = vst [vmem:[%s357 + $0x15] sm:$0x7] %v191
        %377 = vst [vmem:[%s357 + $0x1d] sm:$0xff] %v192
        %378 = vst [vmem:[%s357 + $0x25] sm:$0xff] %v193
        %379 = vst [vmem:[%s357 + $0x2d] sm:$0x7] %v194
        %380 = vst [vmem:[%s357 + $0x35] sm:$0xff] %v195
        %381 = vst [vmem:[%s357 + $0x3d] sm:$0xff] %v196
        %382 = vst [vmem:[%s357 + $0x45] sm:$0x7] %v197
        %383 = vst [vmem:[%s357 + $0x4d] sm:$0xff] %v198
        %384 = vst [vmem:[%s357 + $0x55] sm:$0xff] %v199
        %385 = vst [vmem:[%s357 + $0x5d] sm:$0x7] %v200
        %386 = vst [vmem:[%s357 + $0x65] sm:$0xff] %v201
        %387 = vst [vmem:[%s357 + $0x6d] sm:$0xff] %v202
        %388 = vst [vmem:[%s357 + $0x75] sm:$0x7] %v203
        %389 = vst [vmem:[%s357 + $0x7d] sm:$0xff] %v204
        %390 = vst [vmem:[%s357 + $0x85] sm:$0xff] %v205
        %391 = vst [vmem:[%s357 + $0x8d] sm:$0x7] %v206
        %392 = vst [vmem:[%s357 + $0x95] sm:$0xff] %v207
        %393 = vst [vmem:[%s357 + $0x9d] sm:$0xff] %v208
        %394 = vst [vmem:[%s357 + $0xa5] sm:$0x7] %v209
        %395 = vst [vmem:[%s357 + $0xad] sm:$0xff] %v210
        %396 = vst [vmem:[%s357 + $0xb5] sm:$0xff] %v211
        %397 = vst [vmem:[%s357 + $0xbd] sm:$0x7] %v212
        %s398 = scalar_lea.vmem %s1, 12
        %v399 = vld [vmem:[%s398] sm:$0xf]
        %s400 = scalar_lea.vmem %s175, 576 [#allocation2]
        %401 = vst [vmem:[%s400] sm:$0x1] %v238
        %402 = vst [vmem:[%s400 + $0x18] sm:$0x1] %v252
        %403 = vst [vmem:[%s400 + $0x30] sm:$0x1] %v260
        %404 = vst [vmem:[%s400 + $0x48] sm:$0x1] %v262
        %405 = vst [vmem:[%s400 + $0x60] sm:$0x1] %v245
        %406 = vst [vmem:[%s400 + $0x78] sm:$0x1] %v259
        %407 = vst [vmem:[%s400 + $0x90] sm:$0x1] %v261
        %408 = vst [vmem:[%s400 + $0xa8] sm:$0x1] %v263
        %409 = vst [vmem:[%s400 + $0x1] sm:$0xf] %v399
        %410 = vst [vmem:[%s400 + $0x19] sm:$0xf] %v399
        %411 = vst [vmem:[%s400 + $0x31] sm:$0xf] %v399
        %412 = vst [vmem:[%s400 + $0x49] sm:$0xf] %v399
        %413 = vst [vmem:[%s400 + $0x61] sm:$0xf] %v399
        %414 = vst [vmem:[%s400 + $0x79] sm:$0xf] %v399
        %415 = vst [vmem:[%s400 + $0x91] sm:$0xf] %v399
        %416 = vst [vmem:[%s400 + $0xa9] sm:$0xf] %v399
        %417 = vst [vmem:[%s400 + $0x5] sm:$0xff] %v189
        %418 = vst [vmem:[%s400 + $0xd] sm:$0xff] %v190
        %419 = vst [vmem:[%s400 + $0x15] sm:$0x7] %v191
        %420 = vst [vmem:[%s400 + $0x1d] sm:$0xff] %v192
        %421 = vst [vmem:[%s400 + $0x25] sm:$0xff] %v193
        %422 = vst [vmem:[%s400 + $0x2d] sm:$0x7] %v194
        %423 = vst [vmem:[%s400 + $0x35] sm:$0xff] %v195
        %424 = vst [vmem:[%s400 + $0x3d] sm:$0xff] %v196
        %425 = vst [vmem:[%s400 + $0x45] sm:$0x7] %v197
        %426 = vst [vmem:[%s400 + $0x4d] sm:$0xff] %v198
        %427 = vst [vmem:[%s400 + $0x55] sm:$0xff] %v199
        %428 = vst [vmem:[%s400 + $0x5d] sm:$0x7] %v200
        %429 = vst [vmem:[%s400 + $0x65] sm:$0xff] %v201
        %430 = vst [vmem:[%s400 + $0x6d] sm:$0xff] %v202
        %431 = vst [vmem:[%s400 + $0x75] sm:$0x7] %v203
        %432 = vst [vmem:[%s400 + $0x7d] sm:$0xff] %v204
        %433 = vst [vmem:[%s400 + $0x85] sm:$0xff] %v205
        %434 = vst [vmem:[%s400 + $0x8d] sm:$0x7] %v206
        %435 = vst [vmem:[%s400 + $0x95] sm:$0xff] %v207
        %436 = vst [vmem:[%s400 + $0x9d] sm:$0xff] %v208
        %437 = vst [vmem:[%s400 + $0xa5] sm:$0x7] %v209
        %438 = vst [vmem:[%s400 + $0xad] sm:$0xff] %v210
        %439 = vst [vmem:[%s400 + $0xb5] sm:$0xff] %v211
        %440 = vst [vmem:[%s400 + $0xbd] sm:$0x7] %v212
        %s441 = scalar_lea.vmem %s1, 16
        %v442 = vld [vmem:[%s441] sm:$0xf]
        %s443 = scalar_lea.vmem %s175, 768 [#allocation2]
        %444 = vst [vmem:[%s443] sm:$0x1] %v238
        %445 = vst [vmem:[%s443 + $0x18] sm:$0x1] %v252
        %446 = vst [vmem:[%s443 + $0x30] sm:$0x1] %v260
        %447 = vst [vmem:[%s443 + $0x48] sm:$0x1] %v262
        %448 = vst [vmem:[%s443 + $0x60] sm:$0x1] %v245
        %449 = vst [vmem:[%s443 + $0x78] sm:$0x1] %v259
        %450 = vst [vmem:[%s443 + $0x90] sm:$0x1] %v261
        %451 = vst [vmem:[%s443 + $0xa8] sm:$0x1] %v263
        %452 = vst [vmem:[%s443 + $0x1] sm:$0xf] %v442
        %453 = vst [vmem:[%s443 + $0x19] sm:$0xf] %v442
        %454 = vst [vmem:[%s443 + $0x31] sm:$0xf] %v442
        %455 = vst [vmem:[%s443 + $0x49] sm:$0xf] %v442
        %456 = vst [vmem:[%s443 + $0x61] sm:$0xf] %v442
        %457 = vst [vmem:[%s443 + $0x79] sm:$0xf] %v442
        %458 = vst [vmem:[%s443 + $0x91] sm:$0xf] %v442
        %459 = vst [vmem:[%s443 + $0xa9] sm:$0xf] %v442
        %460 = vst [vmem:[%s443 + $0x5] sm:$0xff] %v189
        %461 = vst [vmem:[%s443 + $0xd] sm:$0xff] %v190
        %462 = vst [vmem:[%s443 + $0x15] sm:$0x7] %v191
        %463 = vst [vmem:[%s443 + $0x1d] sm:$0xff] %v192
        %464 = vst [vmem:[%s443 + $0x25] sm:$0xff] %v193
        %465 = vst [vmem:[%s443 + $0x2d] sm:$0x7] %v194
        %466 = vst [vmem:[%s443 + $0x35] sm:$0xff] %v195
        %467 = vst [vmem:[%s443 + $0x3d] sm:$0xff] %v196
        %468 = vst [vmem:[%s443 + $0x45] sm:$0x7] %v197
        %469 = vst [vmem:[%s443 + $0x4d] sm:$0xff] %v198
        %470 = vst [vmem:[%s443 + $0x55] sm:$0xff] %v199
        %471 = vst [vmem:[%s443 + $0x5d] sm:$0x7] %v200
        %472 = vst [vmem:[%s443 + $0x65] sm:$0xff] %v201
        %473 = vst [vmem:[%s443 + $0x6d] sm:$0xff] %v202
        %474 = vst [vmem:[%s443 + $0x75] sm:$0x7] %v203
        %475 = vst [vmem:[%s443 + $0x7d] sm:$0xff] %v204
        %476 = vst [vmem:[%s443 + $0x85] sm:$0xff] %v205
        %477 = vst [vmem:[%s443 + $0x8d] sm:$0x7] %v206
        %478 = vst [vmem:[%s443 + $0x95] sm:$0xff] %v207
        %479 = vst [vmem:[%s443 + $0x9d] sm:$0xff] %v208
        %480 = vst [vmem:[%s443 + $0xa5] sm:$0x7] %v209
        %481 = vst [vmem:[%s443 + $0xad] sm:$0xff] %v210
        %482 = vst [vmem:[%s443 + $0xb5] sm:$0xff] %v211
        %483 = vst [vmem:[%s443 + $0xbd] sm:$0x7] %v212
        %s484 = sand.u32 %s95, 1
        %s485 = sand.u32 %s95, 1
        %s486 = smul.addr %s485, 960
        %s487 = scalar_lea.vmem [#allocation2], %s486
        // Predicated region
        $region33: #{prompt_learner_forward.1} parent=31 // pred_check
          %p488 = pneg %p105
        $region34: #{prompt_learner_forward.1} parent=31 // pred_check_branch
          %490 = sbr.rel (%p488) target = $region36
        $region35: #{prompt_learner_forward.1} parent=31 // pred_region
          %s491 = smul.u32 8, %s14
          %s492 = smul.addr %s491, 3
          %s493 = smul.addr %s492, 8
          %s494 = scalar_lea.vmem %s3, %s493
          // Predicated region
          $region37: #{prompt_learner_forward.1} parent=35 // pred_check
            _
          $region38: #{prompt_learner_forward.1} parent=35 // pred_check_branch
            %496 = sbr.rel (0) target = $region40
          $region39: #{prompt_learner_forward.1} parent=35 // pred_region
            // Predicated region
            $region41: #{prompt_learner_forward.1} parent=39 // pred_check
              _
            $region42: #{prompt_learner_forward.1} parent=39 // pred_check_branch
              %498 = sbr.rel (0) target = $region44
            $region43: #{prompt_learner_forward.1} parent=39 // pred_region
              // Predicated region
              $region56: #{prompt_learner_forward.1} parent=43 // pred_check
                _
              $region57: #{prompt_learner_forward.1} parent=43 // pred_check_branch
                %751 = sbr.rel (0) target = $region59
              $region58: #{prompt_learner_forward.1} parent=43 // pred_region
                loop: start=0, step=1, limit=1
                $region60: #{prompt_learner_forward.1} parent=58 // loop_pre_header
                  _
                $region61: #{prompt_learner_forward.1} parent=58 // loop_header
                  %s753 = sphi 0, %s757
                  %p754 = scmp.ge.s32.totalorder %s753, 1
                  %s758 = sphi %s487, %s487
                  %s759 = sphi %s494, %s494
                $region62: #{prompt_learner_forward.1} parent=58 // loop_header_branch
                  %756 = sbr.rel (%p754) target = $region66
                $region63: #{prompt_learner_forward.1} parent=58 // loop_body
                  %v760 = vld [vmem:[%s758] sm:$0xff]
                  %761 = vst [vmem:[%s759] sm:$0xff] %v760
                  %v762 = vld [vmem:[%s758 + $0x8] sm:$0xff]
                  %763 = vst [vmem:[%s759 + $0x8] sm:$0xff] %v762
                  %v764 = vld [vmem:[%s758 + $0x10] sm:$0xff]
                  %765 = vst [vmem:[%s759 + $0x10] sm:$0xff] %v764
                  %v766 = vld [vmem:[%s758 + $0x18] sm:$0xff]
                  %767 = vst [vmem:[%s759 + $0x18] sm:$0xff] %v766
                  %v768 = vld [vmem:[%s758 + $0x20] sm:$0xff]
                  %769 = vst [vmem:[%s759 + $0x20] sm:$0xff] %v768
                  %v770 = vld [vmem:[%s758 + $0x28] sm:$0xff]
                  %771 = vst [vmem:[%s759 + $0x28] sm:$0xff] %v770
                  %v772 = vld [vmem:[%s758 + $0x30] sm:$0xff]
                  %773 = vst [vmem:[%s759 + $0x30] sm:$0xff] %v772
                  %v774 = vld [vmem:[%s758 + $0x38] sm:$0xff]
                  %775 = vst [vmem:[%s759 + $0x38] sm:$0xff] %v774
                  %v776 = vld [vmem:[%s758 + $0x40] sm:$0xff]
                  %777 = vst [vmem:[%s759 + $0x40] sm:$0xff] %v776
                  %v778 = vld [vmem:[%s758 + $0x48] sm:$0xff]
                  %779 = vst [vmem:[%s759 + $0x48] sm:$0xff] %v778
                  %v780 = vld [vmem:[%s758 + $0x50] sm:$0xff]
                  %781 = vst [vmem:[%s759 + $0x50] sm:$0xff] %v780
                  %v782 = vld [vmem:[%s758 + $0x58] sm:$0xff]
                  %783 = vst [vmem:[%s759 + $0x58] sm:$0xff] %v782
                  %v784 = vld [vmem:[%s758 + $0x60] sm:$0xff]
                  %785 = vst [vmem:[%s759 + $0x60] sm:$0xff] %v784
                  %v786 = vld [vmem:[%s758 + $0x68] sm:$0xff]
                  %787 = vst [vmem:[%s759 + $0x68] sm:$0xff] %v786
                  %v788 = vld [vmem:[%s758 + $0x70] sm:$0xff]
                  %789 = vst [vmem:[%s759 + $0x70] sm:$0xff] %v788
                  %v790 = vld [vmem:[%s758 + $0x78] sm:$0xff]
                  %791 = vst [vmem:[%s759 + $0x78] sm:$0xff] %v790
                  %v792 = vld [vmem:[%s758 + $0x80] sm:$0xff]
                  %793 = vst [vmem:[%s759 + $0x80] sm:$0xff] %v792
                  %v794 = vld [vmem:[%s758 + $0x88] sm:$0xff]
                  %795 = vst [vmem:[%s759 + $0x88] sm:$0xff] %v794
                  %v796 = vld [vmem:[%s758 + $0x90] sm:$0xff]
                  %797 = vst [vmem:[%s759 + $0x90] sm:$0xff] %v796
                  %v798 = vld [vmem:[%s758 + $0x98] sm:$0xff]
                  %799 = vst [vmem:[%s759 + $0x98] sm:$0xff] %v798
                  %v800 = vld [vmem:[%s758 + $0xa0] sm:$0xff]
                  %801 = vst [vmem:[%s759 + $0xa0] sm:$0xff] %v800
                  %v802 = vld [vmem:[%s758 + $0xa8] sm:$0xff]
                  %803 = vst [vmem:[%s759 + $0xa8] sm:$0xff] %v802
                  %v804 = vld [vmem:[%s758 + $0xb0] sm:$0xff]
                  %805 = vst [vmem:[%s759 + $0xb0] sm:$0xff] %v804
                  %v806 = vld [vmem:[%s758 + $0xb8] sm:$0xff]
                  %807 = vst [vmem:[%s759 + $0xb8] sm:$0xff] %v806
                  %v808 = vld [vmem:[%s758 + $0xc0] sm:$0xff]
                  %809 = vst [vmem:[%s759 + $0x180] sm:$0xff] %v808
                  %v810 = vld [vmem:[%s758 + $0xc8] sm:$0xff]
                  %811 = vst [vmem:[%s759 + $0x188] sm:$0xff] %v810
                  %v812 = vld [vmem:[%s758 + $0xd0] sm:$0xff]
                  %813 = vst [vmem:[%s759 + $0x190] sm:$0xff] %v812
                  %v814 = vld [vmem:[%s758 + $0xd8] sm:$0xff]
                  %815 = vst [vmem:[%s759 + $0x198] sm:$0xff] %v814
                  %v816 = vld [vmem:[%s758 + $0xe0] sm:$0xff]
                  %817 = vst [vmem:[%s759 + $0x1a0] sm:$0xff] %v816
                  %v818 = vld [vmem:[%s758 + $0xe8] sm:$0xff]
                  %819 = vst [vmem:[%s759 + $0x1a8] sm:$0xff] %v818
                  %v820 = vld [vmem:[%s758 + $0xf0] sm:$0xff]
                  %821 = vst [vmem:[%s759 + $0x1b0] sm:$0xff] %v820
                  %v822 = vld [vmem:[%s758 + $0xf8] sm:$0xff]
                  %823 = vst [vmem:[%s759 + $0x1b8] sm:$0xff] %v822
                  %v824 = vld [vmem:[%s758 + $0x100] sm:$0xff]
                  %825 = vst [vmem:[%s759 + $0x1c0] sm:$0xff] %v824
                  %v826 = vld [vmem:[%s758 + $0x108] sm:$0xff]
                  %827 = vst [vmem:[%s759 + $0x1c8] sm:$0xff] %v826
                  %v828 = vld [vmem:[%s758 + $0x110] sm:$0xff]
                  %829 = vst [vmem:[%s759 + $0x1d0] sm:$0xff] %v828
                  %v830 = vld [vmem:[%s758 + $0x118] sm:$0xff]
                  %831 = vst [vmem:[%s759 + $0x1d8] sm:$0xff] %v830
                  %v832 = vld [vmem:[%s758 + $0x120] sm:$0xff]
                  %833 = vst [vmem:[%s759 + $0x1e0] sm:$0xff] %v832
                  %v834 = vld [vmem:[%s758 + $0x128] sm:$0xff]
                  %835 = vst [vmem:[%s759 + $0x1e8] sm:$0xff] %v834
                  %v836 = vld [vmem:[%s758 + $0x130] sm:$0xff]
                  %837 = vst [vmem:[%s759 + $0x1f0] sm:$0xff] %v836
                  %v838 = vld [vmem:[%s758 + $0x138] sm:$0xff]
                  %839 = vst [vmem:[%s759 + $0x1f8] sm:$0xff] %v838
                  %v840 = vld [vmem:[%s758 + $0x140] sm:$0xff]
                  %841 = vst [vmem:[%s759 + $0x200] sm:$0xff] %v840
                  %v842 = vld [vmem:[%s758 + $0x148] sm:$0xff]
                  %843 = vst [vmem:[%s759 + $0x208] sm:$0xff] %v842
                  %v844 = vld [vmem:[%s758 + $0x150] sm:$0xff]
                  %845 = vst [vmem:[%s759 + $0x210] sm:$0xff] %v844
                  %v846 = vld [vmem:[%s758 + $0x158] sm:$0xff]
                  %847 = vst [vmem:[%s759 + $0x218] sm:$0xff] %v846
                  %v848 = vld [vmem:[%s758 + $0x160] sm:$0xff]
                  %849 = vst [vmem:[%s759 + $0x220] sm:$0xff] %v848
                  %v850 = vld [vmem:[%s758 + $0x168] sm:$0xff]
                  %851 = vst [vmem:[%s759 + $0x228] sm:$0xff] %v850
                  %v852 = vld [vmem:[%s758 + $0x170] sm:$0xff]
                  %853 = vst [vmem:[%s759 + $0x230] sm:$0xff] %v852
                  %v854 = vld [vmem:[%s758 + $0x178] sm:$0xff]
                  %855 = vst [vmem:[%s759 + $0x238] sm:$0xff] %v854
                  %v856 = vld [vmem:[%s758 + $0x180] sm:$0xff]
                  %857 = vst [vmem:[%s759 + $0x300] sm:$0xff] %v856
                  %v858 = vld [vmem:[%s758 + $0x188] sm:$0xff]
                  %859 = vst [vmem:[%s759 + $0x308] sm:$0xff] %v858
                  %v860 = vld [vmem:[%s758 + $0x190] sm:$0xff]
                  %861 = vst [vmem:[%s759 + $0x310] sm:$0xff] %v860
                  %v862 = vld [vmem:[%s758 + $0x198] sm:$0xff]
                  %863 = vst [vmem:[%s759 + $0x318] sm:$0xff] %v862
                  %v864 = vld [vmem:[%s758 + $0x1a0] sm:$0xff]
                  %865 = vst [vmem:[%s759 + $0x320] sm:$0xff] %v864
                  %v866 = vld [vmem:[%s758 + $0x1a8] sm:$0xff]
                  %867 = vst [vmem:[%s759 + $0x328] sm:$0xff] %v866
                  %v868 = vld [vmem:[%s758 + $0x1b0] sm:$0xff]
                  %869 = vst [vmem:[%s759 + $0x330] sm:$0xff] %v868
                  %v870 = vld [vmem:[%s758 + $0x1b8] sm:$0xff]
                  %871 = vst [vmem:[%s759 + $0x338] sm:$0xff] %v870
                  %v872 = vld [vmem:[%s758 + $0x1c0] sm:$0xff]
                  %873 = vst [vmem:[%s759 + $0x340] sm:$0xff] %v872
                  %v874 = vld [vmem:[%s758 + $0x1c8] sm:$0xff]
                  %875 = vst [vmem:[%s759 + $0x348] sm:$0xff] %v874
                  %v876 = vld [vmem:[%s758 + $0x1d0] sm:$0xff]
                  %877 = vst [vmem:[%s759 + $0x350] sm:$0xff] %v876
                  %v878 = vld [vmem:[%s758 + $0x1d8] sm:$0xff]
                  %879 = vst [vmem:[%s759 + $0x358] sm:$0xff] %v878
                  %v880 = vld [vmem:[%s758 + $0x1e0] sm:$0xff]
                  %881 = vst [vmem:[%s759 + $0x360] sm:$0xff] %v880
                  %v882 = vld [vmem:[%s758 + $0x1e8] sm:$0xff]
                  %883 = vst [vmem:[%s759 + $0x368] sm:$0xff] %v882
                  %v884 = vld [vmem:[%s758 + $0x1f0] sm:$0xff]
                  %885 = vst [vmem:[%s759 + $0x370] sm:$0xff] %v884
                  %v886 = vld [vmem:[%s758 + $0x1f8] sm:$0xff]
                  %887 = vst [vmem:[%s759 + $0x378] sm:$0xff] %v886
                  %v888 = vld [vmem:[%s758 + $0x200] sm:$0xff]
                  %889 = vst [vmem:[%s759 + $0x380] sm:$0xff] %v888
                  %v890 = vld [vmem:[%s758 + $0x208] sm:$0xff]
                  %891 = vst [vmem:[%s759 + $0x388] sm:$0xff] %v890
                  %v892 = vld [vmem:[%s758 + $0x210] sm:$0xff]
                  %893 = vst [vmem:[%s759 + $0x390] sm:$0xff] %v892
                  %v894 = vld [vmem:[%s758 + $0x218] sm:$0xff]
                  %895 = vst [vmem:[%s759 + $0x398] sm:$0xff] %v894
                  %v896 = vld [vmem:[%s758 + $0x220] sm:$0xff]
                  %897 = vst [vmem:[%s759 + $0x3a0] sm:$0xff] %v896
                  %v898 = vld [vmem:[%s758 + $0x228] sm:$0xff]
                  %899 = vst [vmem:[%s759 + $0x3a8] sm:$0xff] %v898
                  %v900 = vld [vmem:[%s758 + $0x230] sm:$0xff]
                  %901 = vst [vmem:[%s759 + $0x3b0] sm:$0xff] %v900
                  %v902 = vld [vmem:[%s758 + $0x238] sm:$0xff]
                  %903 = vst [vmem:[%s759 + $0x3b8] sm:$0xff] %v902
                  %v904 = vld [vmem:[%s758 + $0x240] sm:$0xff]
                  %905 = vst [vmem:[%s759 + $0x480] sm:$0xff] %v904
                  %v906 = vld [vmem:[%s758 + $0x248] sm:$0xff]
                  %907 = vst [vmem:[%s759 + $0x488] sm:$0xff] %v906
                  %v908 = vld [vmem:[%s758 + $0x250] sm:$0xff]
                  %909 = vst [vmem:[%s759 + $0x490] sm:$0xff] %v908
                  %v910 = vld [vmem:[%s758 + $0x258] sm:$0xff]
                  %911 = vst [vmem:[%s759 + $0x498] sm:$0xff] %v910
                  %v912 = vld [vmem:[%s758 + $0x260] sm:$0xff]
                  %913 = vst [vmem:[%s759 + $0x4a0] sm:$0xff] %v912
                  %v914 = vld [vmem:[%s758 + $0x268] sm:$0xff]
                  %915 = vst [vmem:[%s759 + $0x4a8] sm:$0xff] %v914
                  %v916 = vld [vmem:[%s758 + $0x270] sm:$0xff]
                  %917 = vst [vmem:[%s759 + $0x4b0] sm:$0xff] %v916
                  %v918 = vld [vmem:[%s758 + $0x278] sm:$0xff]
                  %919 = vst [vmem:[%s759 + $0x4b8] sm:$0xff] %v918
                  %v920 = vld [vmem:[%s758 + $0x280] sm:$0xff]
                  %921 = vst [vmem:[%s759 + $0x4c0] sm:$0xff] %v920
                  %v922 = vld [vmem:[%s758 + $0x288] sm:$0xff]
                  %923 = vst [vmem:[%s759 + $0x4c8] sm:$0xff] %v922
                  %v924 = vld [vmem:[%s758 + $0x290] sm:$0xff]
                  %925 = vst [vmem:[%s759 + $0x4d0] sm:$0xff] %v924
                  %v926 = vld [vmem:[%s758 + $0x298] sm:$0xff]
                  %927 = vst [vmem:[%s759 + $0x4d8] sm:$0xff] %v926
                  %v928 = vld [vmem:[%s758 + $0x2a0] sm:$0xff]
                  %929 = vst [vmem:[%s759 + $0x4e0] sm:$0xff] %v928
                  %v930 = vld [vmem:[%s758 + $0x2a8] sm:$0xff]
                  %931 = vst [vmem:[%s759 + $0x4e8] sm:$0xff] %v930
                  %v932 = vld [vmem:[%s758 + $0x2b0] sm:$0xff]
                  %933 = vst [vmem:[%s759 + $0x4f0] sm:$0xff] %v932
                  %v934 = vld [vmem:[%s758 + $0x2b8] sm:$0xff]
                  %935 = vst [vmem:[%s759 + $0x4f8] sm:$0xff] %v934
                  %v936 = vld [vmem:[%s758 + $0x2c0] sm:$0xff]
                  %937 = vst [vmem:[%s759 + $0x500] sm:$0xff] %v936
                  %v938 = vld [vmem:[%s758 + $0x2c8] sm:$0xff]
                  %939 = vst [vmem:[%s759 + $0x508] sm:$0xff] %v938
                  %v940 = vld [vmem:[%s758 + $0x2d0] sm:$0xff]
                  %941 = vst [vmem:[%s759 + $0x510] sm:$0xff] %v940
                  %v942 = vld [vmem:[%s758 + $0x2d8] sm:$0xff]
                  %943 = vst [vmem:[%s759 + $0x518] sm:$0xff] %v942
                  %v944 = vld [vmem:[%s758 + $0x2e0] sm:$0xff]
                  %945 = vst [vmem:[%s759 + $0x520] sm:$0xff] %v944
                  %v946 = vld [vmem:[%s758 + $0x2e8] sm:$0xff]
                  %947 = vst [vmem:[%s759 + $0x528] sm:$0xff] %v946
                  %v948 = vld [vmem:[%s758 + $0x2f0] sm:$0xff]
                  %949 = vst [vmem:[%s759 + $0x530] sm:$0xff] %v948
                  %v950 = vld [vmem:[%s758 + $0x2f8] sm:$0xff]
                  %951 = vst [vmem:[%s759 + $0x538] sm:$0xff] %v950
                  %v952 = vld [vmem:[%s758 + $0x300] sm:$0xff]
                  %953 = vst [vmem:[%s759 + $0x600] sm:$0xff] %v952
                  %v954 = vld [vmem:[%s758 + $0x308] sm:$0xff]
                  %955 = vst [vmem:[%s759 + $0x608] sm:$0xff] %v954
                  %v956 = vld [vmem:[%s758 + $0x310] sm:$0xff]
                  %957 = vst [vmem:[%s759 + $0x610] sm:$0xff] %v956
                  %v958 = vld [vmem:[%s758 + $0x318] sm:$0xff]
                  %959 = vst [vmem:[%s759 + $0x618] sm:$0xff] %v958
                  %v960 = vld [vmem:[%s758 + $0x320] sm:$0xff]
                  %961 = vst [vmem:[%s759 + $0x620] sm:$0xff] %v960
                  %v962 = vld [vmem:[%s758 + $0x328] sm:$0xff]
                  %963 = vst [vmem:[%s759 + $0x628] sm:$0xff] %v962
                  %v964 = vld [vmem:[%s758 + $0x330] sm:$0xff]
                  %965 = vst [vmem:[%s759 + $0x630] sm:$0xff] %v964
                  %v966 = vld [vmem:[%s758 + $0x338] sm:$0xff]
                  %967 = vst [vmem:[%s759 + $0x638] sm:$0xff] %v966
                  %v968 = vld [vmem:[%s758 + $0x340] sm:$0xff]
                  %969 = vst [vmem:[%s759 + $0x640] sm:$0xff] %v968
                  %v970 = vld [vmem:[%s758 + $0x348] sm:$0xff]
                  %971 = vst [vmem:[%s759 + $0x648] sm:$0xff] %v970
                  %v972 = vld [vmem:[%s758 + $0x350] sm:$0xff]
                  %973 = vst [vmem:[%s759 + $0x650] sm:$0xff] %v972
                  %v974 = vld [vmem:[%s758 + $0x358] sm:$0xff]
                  %975 = vst [vmem:[%s759 + $0x658] sm:$0xff] %v974
                  %v976 = vld [vmem:[%s758 + $0x360] sm:$0xff]
                  %977 = vst [vmem:[%s759 + $0x660] sm:$0xff] %v976
                  %v978 = vld [vmem:[%s758 + $0x368] sm:$0xff]
                  %979 = vst [vmem:[%s759 + $0x668] sm:$0xff] %v978
                  %v980 = vld [vmem:[%s758 + $0x370] sm:$0xff]
                  %981 = vst [vmem:[%s759 + $0x670] sm:$0xff] %v980
                  %v982 = vld [vmem:[%s758 + $0x378] sm:$0xff]
                  %983 = vst [vmem:[%s759 + $0x678] sm:$0xff] %v982
                  %v984 = vld [vmem:[%s758 + $0x380] sm:$0xff]
                  %985 = vst [vmem:[%s759 + $0x680] sm:$0xff] %v984
                  %v986 = vld [vmem:[%s758 + $0x388] sm:$0xff]
                  %987 = vst [vmem:[%s759 + $0x688] sm:$0xff] %v986
                  %v988 = vld [vmem:[%s758 + $0x390] sm:$0xff]
                  %989 = vst [vmem:[%s759 + $0x690] sm:$0xff] %v988
                  %v990 = vld [vmem:[%s758 + $0x398] sm:$0xff]
                  %991 = vst [vmem:[%s759 + $0x698] sm:$0xff] %v990
                  %v992 = vld [vmem:[%s758 + $0x3a0] sm:$0xff]
                  %993 = vst [vmem:[%s759 + $0x6a0] sm:$0xff] %v992
                  %v994 = vld [vmem:[%s758 + $0x3a8] sm:$0xff]
                  %995 = vst [vmem:[%s759 + $0x6a8] sm:$0xff] %v994
                  %v996 = vld [vmem:[%s758 + $0x3b0] sm:$0xff]
                  %997 = vst [vmem:[%s759 + $0x6b0] sm:$0xff] %v996
                  %v998 = vld [vmem:[%s758 + $0x3b8] sm:$0xff]
                  %999 = vst [vmem:[%s759 + $0x6b8] sm:$0xff] %v998
                $region64: #{prompt_learner_forward.1} parent=58 // loop_footer
                  %s757 = sadd.s32 1, %s753
                $region65: #{prompt_learner_forward.1} parent=58 // loop_footer_branch
                  %752 = sbr.rel target = $region61
                $region66: #{prompt_learner_forward.1} parent=58 // loop_exit
                  _
              $region59: #{prompt_learner_forward.1} parent=43 // pred_fallthru
                _
              // Predicated region
              $region67: #{prompt_learner_forward.1} parent=43 // pred_check
                _
              $region68: #{prompt_learner_forward.1} parent=43 // pred_check_branch
                %1001 = sbr.rel target = $region70
              $region69: #{prompt_learner_forward.1} parent=43 // pred_region
                _
              $region70: #{prompt_learner_forward.1} parent=43 // pred_fallthru
                _
            $region44: #{prompt_learner_forward.1} parent=39 // pred_fallthru
              _
            // Predicated region
            $region45: #{prompt_learner_forward.1} parent=39 // pred_check
              _
            $region46: #{prompt_learner_forward.1} parent=39 // pred_check_branch
              %500 = sbr.rel target = $region48
            $region47: #{prompt_learner_forward.1} parent=39 // pred_region
              loop: start=0, step=1, limit=1
              $region49: #{prompt_learner_forward.1} parent=47 // loop_pre_header
                _
              $region50: #{prompt_learner_forward.1} parent=47 // loop_header
                %s503 = sphi 0, %s507
                %p504 = scmp.ge.s32.totalorder %s503, 1
                %s508 = sphi %s487, %s487
                %s509 = sphi %s494, %s494
              $region51: #{prompt_learner_forward.1} parent=47 // loop_header_branch
                %506 = sbr.rel (%p504) target = $region55
              $region52: #{prompt_learner_forward.1} parent=47 // loop_body
                %v510 = vld [vmem:[%s508] sm:$0xff]
                %511 = vst [vmem:[%s509] sm:$0xff] %v510
                %v512 = vld [vmem:[%s508 + $0x8] sm:$0xff]
                %513 = vst [vmem:[%s509 + $0x8] sm:$0xff] %v512
                %v514 = vld [vmem:[%s508 + $0x10] sm:$0xff]
                %515 = vst [vmem:[%s509 + $0x10] sm:$0xff] %v514
                %v516 = vld [vmem:[%s508 + $0x18] sm:$0xff]
                %517 = vst [vmem:[%s509 + $0x18] sm:$0xff] %v516
                %v518 = vld [vmem:[%s508 + $0x20] sm:$0xff]
                %519 = vst [vmem:[%s509 + $0x20] sm:$0xff] %v518
                %v520 = vld [vmem:[%s508 + $0x28] sm:$0xff]
                %521 = vst [vmem:[%s509 + $0x28] sm:$0xff] %v520
                %v522 = vld [vmem:[%s508 + $0x30] sm:$0xff]
                %523 = vst [vmem:[%s509 + $0x30] sm:$0xff] %v522
                %v524 = vld [vmem:[%s508 + $0x38] sm:$0xff]
                %525 = vst [vmem:[%s509 + $0x38] sm:$0xff] %v524
                %v526 = vld [vmem:[%s508 + $0x40] sm:$0xff]
                %527 = vst [vmem:[%s509 + $0x40] sm:$0xff] %v526
                %v528 = vld [vmem:[%s508 + $0x48] sm:$0xff]
                %529 = vst [vmem:[%s509 + $0x48] sm:$0xff] %v528
                %v530 = vld [vmem:[%s508 + $0x50] sm:$0xff]
                %531 = vst [vmem:[%s509 + $0x50] sm:$0xff] %v530
                %v532 = vld [vmem:[%s508 + $0x58] sm:$0xff]
                %533 = vst [vmem:[%s509 + $0x58] sm:$0xff] %v532
                %v534 = vld [vmem:[%s508 + $0x60] sm:$0xff]
                %535 = vst [vmem:[%s509 + $0x60] sm:$0xff] %v534
                %v536 = vld [vmem:[%s508 + $0x68] sm:$0xff]
                %537 = vst [vmem:[%s509 + $0x68] sm:$0xff] %v536
                %v538 = vld [vmem:[%s508 + $0x70] sm:$0xff]
                %539 = vst [vmem:[%s509 + $0x70] sm:$0xff] %v538
                %v540 = vld [vmem:[%s508 + $0x78] sm:$0xff]
                %541 = vst [vmem:[%s509 + $0x78] sm:$0xff] %v540
                %v542 = vld [vmem:[%s508 + $0x80] sm:$0xff]
                %543 = vst [vmem:[%s509 + $0x80] sm:$0xff] %v542
                %v544 = vld [vmem:[%s508 + $0x88] sm:$0xff]
                %545 = vst [vmem:[%s509 + $0x88] sm:$0xff] %v544
                %v546 = vld [vmem:[%s508 + $0x90] sm:$0xff]
                %547 = vst [vmem:[%s509 + $0x90] sm:$0xff] %v546
                %v548 = vld [vmem:[%s508 + $0x98] sm:$0xff]
                %549 = vst [vmem:[%s509 + $0x98] sm:$0xff] %v548
                %v550 = vld [vmem:[%s508 + $0xa0] sm:$0xff]
                %551 = vst [vmem:[%s509 + $0xa0] sm:$0xff] %v550
                %v552 = vld [vmem:[%s508 + $0xa8] sm:$0xff]
                %553 = vst [vmem:[%s509 + $0xa8] sm:$0xff] %v552
                %v554 = vld [vmem:[%s508 + $0xb0] sm:$0xff]
                %555 = vst [vmem:[%s509 + $0xb0] sm:$0xff] %v554
                %v556 = vld [vmem:[%s508 + $0xb8] sm:$0xff]
                %557 = vst [vmem:[%s509 + $0xb8] sm:$0xff] %v556
                %v558 = vld [vmem:[%s508 + $0xc0] sm:$0xff]
                %559 = vst [vmem:[%s509 + $0x180] sm:$0xff] %v558
                %v560 = vld [vmem:[%s508 + $0xc8] sm:$0xff]
                %561 = vst [vmem:[%s509 + $0x188] sm:$0xff] %v560
                %v562 = vld [vmem:[%s508 + $0xd0] sm:$0xff]
                %563 = vst [vmem:[%s509 + $0x190] sm:$0xff] %v562
                %v564 = vld [vmem:[%s508 + $0xd8] sm:$0xff]
                %565 = vst [vmem:[%s509 + $0x198] sm:$0xff] %v564
                %v566 = vld [vmem:[%s508 + $0xe0] sm:$0xff]
                %567 = vst [vmem:[%s509 + $0x1a0] sm:$0xff] %v566
                %v568 = vld [vmem:[%s508 + $0xe8] sm:$0xff]
                %569 = vst [vmem:[%s509 + $0x1a8] sm:$0xff] %v568
                %v570 = vld [vmem:[%s508 + $0xf0] sm:$0xff]
                %571 = vst [vmem:[%s509 + $0x1b0] sm:$0xff] %v570
                %v572 = vld [vmem:[%s508 + $0xf8] sm:$0xff]
                %573 = vst [vmem:[%s509 + $0x1b8] sm:$0xff] %v572
                %v574 = vld [vmem:[%s508 + $0x100] sm:$0xff]
                %575 = vst [vmem:[%s509 + $0x1c0] sm:$0xff] %v574
                %v576 = vld [vmem:[%s508 + $0x108] sm:$0xff]
                %577 = vst [vmem:[%s509 + $0x1c8] sm:$0xff] %v576
                %v578 = vld [vmem:[%s508 + $0x110] sm:$0xff]
                %579 = vst [vmem:[%s509 + $0x1d0] sm:$0xff] %v578
                %v580 = vld [vmem:[%s508 + $0x118] sm:$0xff]
                %581 = vst [vmem:[%s509 + $0x1d8] sm:$0xff] %v580
                %v582 = vld [vmem:[%s508 + $0x120] sm:$0xff]
                %583 = vst [vmem:[%s509 + $0x1e0] sm:$0xff] %v582
                %v584 = vld [vmem:[%s508 + $0x128] sm:$0xff]
                %585 = vst [vmem:[%s509 + $0x1e8] sm:$0xff] %v584
                %v586 = vld [vmem:[%s508 + $0x130] sm:$0xff]
                %587 = vst [vmem:[%s509 + $0x1f0] sm:$0xff] %v586
                %v588 = vld [vmem:[%s508 + $0x138] sm:$0xff]
                %589 = vst [vmem:[%s509 + $0x1f8] sm:$0xff] %v588
                %v590 = vld [vmem:[%s508 + $0x140] sm:$0xff]
                %591 = vst [vmem:[%s509 + $0x200] sm:$0xff] %v590
                %v592 = vld [vmem:[%s508 + $0x148] sm:$0xff]
                %593 = vst [vmem:[%s509 + $0x208] sm:$0xff] %v592
                %v594 = vld [vmem:[%s508 + $0x150] sm:$0xff]
                %595 = vst [vmem:[%s509 + $0x210] sm:$0xff] %v594
                %v596 = vld [vmem:[%s508 + $0x158] sm:$0xff]
                %597 = vst [vmem:[%s509 + $0x218] sm:$0xff] %v596
                %v598 = vld [vmem:[%s508 + $0x160] sm:$0xff]
                %599 = vst [vmem:[%s509 + $0x220] sm:$0xff] %v598
                %v600 = vld [vmem:[%s508 + $0x168] sm:$0xff]
                %601 = vst [vmem:[%s509 + $0x228] sm:$0xff] %v600
                %v602 = vld [vmem:[%s508 + $0x170] sm:$0xff]
                %603 = vst [vmem:[%s509 + $0x230] sm:$0xff] %v602
                %v604 = vld [vmem:[%s508 + $0x178] sm:$0xff]
                %605 = vst [vmem:[%s509 + $0x238] sm:$0xff] %v604
                %v606 = vld [vmem:[%s508 + $0x180] sm:$0xff]
                %607 = vst [vmem:[%s509 + $0x300] sm:$0xff] %v606
                %v608 = vld [vmem:[%s508 + $0x188] sm:$0xff]
                %609 = vst [vmem:[%s509 + $0x308] sm:$0xff] %v608
                %v610 = vld [vmem:[%s508 + $0x190] sm:$0xff]
                %611 = vst [vmem:[%s509 + $0x310] sm:$0xff] %v610
                %v612 = vld [vmem:[%s508 + $0x198] sm:$0xff]
                %613 = vst [vmem:[%s509 + $0x318] sm:$0xff] %v612
                %v614 = vld [vmem:[%s508 + $0x1a0] sm:$0xff]
                %615 = vst [vmem:[%s509 + $0x320] sm:$0xff] %v614
                %v616 = vld [vmem:[%s508 + $0x1a8] sm:$0xff]
                %617 = vst [vmem:[%s509 + $0x328] sm:$0xff] %v616
                %v618 = vld [vmem:[%s508 + $0x1b0] sm:$0xff]
                %619 = vst [vmem:[%s509 + $0x330] sm:$0xff] %v618
                %v620 = vld [vmem:[%s508 + $0x1b8] sm:$0xff]
                %621 = vst [vmem:[%s509 + $0x338] sm:$0xff] %v620
                %v622 = vld [vmem:[%s508 + $0x1c0] sm:$0xff]
                %623 = vst [vmem:[%s509 + $0x340] sm:$0xff] %v622
                %v624 = vld [vmem:[%s508 + $0x1c8] sm:$0xff]
                %625 = vst [vmem:[%s509 + $0x348] sm:$0xff] %v624
                %v626 = vld [vmem:[%s508 + $0x1d0] sm:$0xff]
                %627 = vst [vmem:[%s509 + $0x350] sm:$0xff] %v626
                %v628 = vld [vmem:[%s508 + $0x1d8] sm:$0xff]
                %629 = vst [vmem:[%s509 + $0x358] sm:$0xff] %v628
                %v630 = vld [vmem:[%s508 + $0x1e0] sm:$0xff]
                %631 = vst [vmem:[%s509 + $0x360] sm:$0xff] %v630
                %v632 = vld [vmem:[%s508 + $0x1e8] sm:$0xff]
                %633 = vst [vmem:[%s509 + $0x368] sm:$0xff] %v632
                %v634 = vld [vmem:[%s508 + $0x1f0] sm:$0xff]
                %635 = vst [vmem:[%s509 + $0x370] sm:$0xff] %v634
                %v636 = vld [vmem:[%s508 + $0x1f8] sm:$0xff]
                %637 = vst [vmem:[%s509 + $0x378] sm:$0xff] %v636
                %v638 = vld [vmem:[%s508 + $0x200] sm:$0xff]
                %639 = vst [vmem:[%s509 + $0x380] sm:$0xff] %v638
                %v640 = vld [vmem:[%s508 + $0x208] sm:$0xff]
                %641 = vst [vmem:[%s509 + $0x388] sm:$0xff] %v640
                %v642 = vld [vmem:[%s508 + $0x210] sm:$0xff]
                %643 = vst [vmem:[%s509 + $0x390] sm:$0xff] %v642
                %v644 = vld [vmem:[%s508 + $0x218] sm:$0xff]
                %645 = vst [vmem:[%s509 + $0x398] sm:$0xff] %v644
                %v646 = vld [vmem:[%s508 + $0x220] sm:$0xff]
                %647 = vst [vmem:[%s509 + $0x3a0] sm:$0xff] %v646
                %v648 = vld [vmem:[%s508 + $0x228] sm:$0xff]
                %649 = vst [vmem:[%s509 + $0x3a8] sm:$0xff] %v648
                %v650 = vld [vmem:[%s508 + $0x230] sm:$0xff]
                %651 = vst [vmem:[%s509 + $0x3b0] sm:$0xff] %v650
                %v652 = vld [vmem:[%s508 + $0x238] sm:$0xff]
                %653 = vst [vmem:[%s509 + $0x3b8] sm:$0xff] %v652
                %v654 = vld [vmem:[%s508 + $0x240] sm:$0xff]
                %655 = vst [vmem:[%s509 + $0x480] sm:$0xff] %v654
                %v656 = vld [vmem:[%s508 + $0x248] sm:$0xff]
                %657 = vst [vmem:[%s509 + $0x488] sm:$0xff] %v656
                %v658 = vld [vmem:[%s508 + $0x250] sm:$0xff]
                %659 = vst [vmem:[%s509 + $0x490] sm:$0xff] %v658
                %v660 = vld [vmem:[%s508 + $0x258] sm:$0xff]
                %661 = vst [vmem:[%s509 + $0x498] sm:$0xff] %v660
                %v662 = vld [vmem:[%s508 + $0x260] sm:$0xff]
                %663 = vst [vmem:[%s509 + $0x4a0] sm:$0xff] %v662
                %v664 = vld [vmem:[%s508 + $0x268] sm:$0xff]
                %665 = vst [vmem:[%s509 + $0x4a8] sm:$0xff] %v664
                %v666 = vld [vmem:[%s508 + $0x270] sm:$0xff]
                %667 = vst [vmem:[%s509 + $0x4b0] sm:$0xff] %v666
                %v668 = vld [vmem:[%s508 + $0x278] sm:$0xff]
                %669 = vst [vmem:[%s509 + $0x4b8] sm:$0xff] %v668
                %v670 = vld [vmem:[%s508 + $0x280] sm:$0xff]
                %671 = vst [vmem:[%s509 + $0x4c0] sm:$0xff] %v670
                %v672 = vld [vmem:[%s508 + $0x288] sm:$0xff]
                %673 = vst [vmem:[%s509 + $0x4c8] sm:$0xff] %v672
                %v674 = vld [vmem:[%s508 + $0x290] sm:$0xff]
                %675 = vst [vmem:[%s509 + $0x4d0] sm:$0xff] %v674
                %v676 = vld [vmem:[%s508 + $0x298] sm:$0xff]
                %677 = vst [vmem:[%s509 + $0x4d8] sm:$0xff] %v676
                %v678 = vld [vmem:[%s508 + $0x2a0] sm:$0xff]
                %679 = vst [vmem:[%s509 + $0x4e0] sm:$0xff] %v678
                %v680 = vld [vmem:[%s508 + $0x2a8] sm:$0xff]
                %681 = vst [vmem:[%s509 + $0x4e8] sm:$0xff] %v680
                %v682 = vld [vmem:[%s508 + $0x2b0] sm:$0xff]
                %683 = vst [vmem:[%s509 + $0x4f0] sm:$0xff] %v682
                %v684 = vld [vmem:[%s508 + $0x2b8] sm:$0xff]
                %685 = vst [vmem:[%s509 + $0x4f8] sm:$0xff] %v684
                %v686 = vld [vmem:[%s508 + $0x2c0] sm:$0xff]
                %687 = vst [vmem:[%s509 + $0x500] sm:$0xff] %v686
                %v688 = vld [vmem:[%s508 + $0x2c8] sm:$0xff]
                %689 = vst [vmem:[%s509 + $0x508] sm:$0xff] %v688
                %v690 = vld [vmem:[%s508 + $0x2d0] sm:$0xff]
                %691 = vst [vmem:[%s509 + $0x510] sm:$0xff] %v690
                %v692 = vld [vmem:[%s508 + $0x2d8] sm:$0xff]
                %693 = vst [vmem:[%s509 + $0x518] sm:$0xff] %v692
                %v694 = vld [vmem:[%s508 + $0x2e0] sm:$0xff]
                %695 = vst [vmem:[%s509 + $0x520] sm:$0xff] %v694
                %v696 = vld [vmem:[%s508 + $0x2e8] sm:$0xff]
                %697 = vst [vmem:[%s509 + $0x528] sm:$0xff] %v696
                %v698 = vld [vmem:[%s508 + $0x2f0] sm:$0xff]
                %699 = vst [vmem:[%s509 + $0x530] sm:$0xff] %v698
                %v700 = vld [vmem:[%s508 + $0x2f8] sm:$0xff]
                %701 = vst [vmem:[%s509 + $0x538] sm:$0xff] %v700
                %v702 = vld [vmem:[%s508 + $0x300] sm:$0xff]
                %703 = vst [vmem:[%s509 + $0x600] sm:$0xff] %v702
                %v704 = vld [vmem:[%s508 + $0x308] sm:$0xff]
                %705 = vst [vmem:[%s509 + $0x608] sm:$0xff] %v704
                %v706 = vld [vmem:[%s508 + $0x310] sm:$0xff]
                %707 = vst [vmem:[%s509 + $0x610] sm:$0xff] %v706
                %v708 = vld [vmem:[%s508 + $0x318] sm:$0xff]
                %709 = vst [vmem:[%s509 + $0x618] sm:$0xff] %v708
                %v710 = vld [vmem:[%s508 + $0x320] sm:$0xff]
                %711 = vst [vmem:[%s509 + $0x620] sm:$0xff] %v710
                %v712 = vld [vmem:[%s508 + $0x328] sm:$0xff]
                %713 = vst [vmem:[%s509 + $0x628] sm:$0xff] %v712
                %v714 = vld [vmem:[%s508 + $0x330] sm:$0xff]
                %715 = vst [vmem:[%s509 + $0x630] sm:$0xff] %v714
                %v716 = vld [vmem:[%s508 + $0x338] sm:$0xff]
                %717 = vst [vmem:[%s509 + $0x638] sm:$0xff] %v716
                %v718 = vld [vmem:[%s508 + $0x340] sm:$0xff]
                %719 = vst [vmem:[%s509 + $0x640] sm:$0xff] %v718
                %v720 = vld [vmem:[%s508 + $0x348] sm:$0xff]
                %721 = vst [vmem:[%s509 + $0x648] sm:$0xff] %v720
                %v722 = vld [vmem:[%s508 + $0x350] sm:$0xff]
                %723 = vst [vmem:[%s509 + $0x650] sm:$0xff] %v722
                %v724 = vld [vmem:[%s508 + $0x358] sm:$0xff]
                %725 = vst [vmem:[%s509 + $0x658] sm:$0xff] %v724
                %v726 = vld [vmem:[%s508 + $0x360] sm:$0xff]
                %727 = vst [vmem:[%s509 + $0x660] sm:$0xff] %v726
                %v728 = vld [vmem:[%s508 + $0x368] sm:$0xff]
                %729 = vst [vmem:[%s509 + $0x668] sm:$0xff] %v728
                %v730 = vld [vmem:[%s508 + $0x370] sm:$0xff]
                %731 = vst [vmem:[%s509 + $0x670] sm:$0xff] %v730
                %v732 = vld [vmem:[%s508 + $0x378] sm:$0xff]
                %733 = vst [vmem:[%s509 + $0x678] sm:$0xff] %v732
                %v734 = vld [vmem:[%s508 + $0x380] sm:$0xff]
                %735 = vst [vmem:[%s509 + $0x680] sm:$0xff] %v734
                %v736 = vld [vmem:[%s508 + $0x388] sm:$0xff]
                %737 = vst [vmem:[%s509 + $0x688] sm:$0xff] %v736
                %v738 = vld [vmem:[%s508 + $0x390] sm:$0xff]
                %739 = vst [vmem:[%s509 + $0x690] sm:$0xff] %v738
                %v740 = vld [vmem:[%s508 + $0x398] sm:$0xff]
                %741 = vst [vmem:[%s509 + $0x698] sm:$0xff] %v740
                %v742 = vld [vmem:[%s508 + $0x3a0] sm:$0xff]
                %743 = vst [vmem:[%s509 + $0x6a0] sm:$0xff] %v742
                %v744 = vld [vmem:[%s508 + $0x3a8] sm:$0xff]
                %745 = vst [vmem:[%s509 + $0x6a8] sm:$0xff] %v744
                %v746 = vld [vmem:[%s508 + $0x3b0] sm:$0xff]
                %747 = vst [vmem:[%s509 + $0x6b0] sm:$0xff] %v746
                %v748 = vld [vmem:[%s508 + $0x3b8] sm:$0xff]
                %749 = vst [vmem:[%s509 + $0x6b8] sm:$0xff] %v748
              $region53: #{prompt_learner_forward.1} parent=47 // loop_footer
                %s507 = sadd.s32 1, %s503
              $region54: #{prompt_learner_forward.1} parent=47 // loop_footer_branch
                %502 = sbr.rel target = $region50
              $region55: #{prompt_learner_forward.1} parent=47 // loop_exit
                _
            $region48: #{prompt_learner_forward.1} parent=39 // pred_fallthru
              _
          $region40: #{prompt_learner_forward.1} parent=35 // pred_fallthru
            _
          %1002 = vnop
        $region36: #{prompt_learner_forward.1} parent=31 // pred_fallthru
          _
      $region32: #{prompt_learner_forward.1} parent=5 // pred_fallthru
        _
      %p1003 = scmp.le.s32.totalorder 2, %s9
      // Predicated region
      $region71: #{prompt_learner_forward.1} parent=5 // pred_check
        %p1004 = pneg %p1003
      $region72: #{prompt_learner_forward.1} parent=5 // pred_check_branch
        %1006 = sbr.rel (%p1004) target = $region74
      $region73: #{prompt_learner_forward.1} parent=5 // pred_region
        %s1007 = ssub.s32 %s9, 2
        // Predicated region
        $region75: #{prompt_learner_forward.1} parent=73 // pred_check
          %p1008 = pneg %p111
        $region76: #{prompt_learner_forward.1} parent=73 // pred_check_branch
          %1010 = sbr.rel (%p1008) target = $region78
        $region77: #{prompt_learner_forward.1} parent=73 // pred_region
          %s1011 = sand.u32 %s96, 1
          %s1012 = sand.u32 %s96, 1
          %s1013 = smul.addr %s1012, 960
          %s1014 = scalar_lea.vmem [#allocation2], %s1013
        $region78: #{prompt_learner_forward.1} parent=73 // pred_fallthru
          _
      $region74: #{prompt_learner_forward.1} parent=5 // pred_fallthru
        _
    $region6: #{prompt_learner_forward.1} parent=1 // loop_footer
      %s13 = sadd.s32 1, %s9
    $region7: #{prompt_learner_forward.1} parent=1 // loop_footer_branch
      %8 = sbr.rel target = $region3
    $region8: #{prompt_learner_forward.1} parent=1 // loop_exit
      _

</llo_original>
